<compile_context>
chip_gen: v6e
topology: v6e:2x2x1
jax: 0.10.0
libtpu: 0.0.40
codegen_flags: <defaults>
</compile_context>

<pallas_src>
import jax
import jax.numpy as jnp
from jax import lax
from jax.experimental import pallas as pl
from jax.experimental.pallas import tpu as pltpu  # noqa: F401  (not required at these sizes)


def _attn_kernel(x_ref, wqkv_ref, bqkv_ref, wo_ref, bo_ref, out_ref):
    B, T, D = x_ref.shape
    O = wo_ref.shape[0]

    # Whole batch as one (B*T, D) slab -> single fused QKV projection on the MXU.
    x2d = x_ref[...].reshape(B * T, D)                                    # (B*T, D)
    qkv = jnp.dot(x2d, wqkv_ref[...],
                  preferred_element_type=jnp.float32) + bqkv_ref[...]     # (B*T, 3O) f32

    q = qkv[:, 0 * O:1 * O].reshape(B, T, O)
    k = qkv[:, 1 * O:2 * O].reshape(B, T, O)
    v = qkv[:, 2 * O:3 * O].reshape(B, T, O)

    # scores[b,t,s] = q[b,t,:] . k[b,s,:]  -- K consumed transposed by the MXU,
    # no k.T materialization / XLU transpose.  Scale matches PyTorch `/ 64**0.5`.
    scores = lax.dot_general(
        q, k,
        dimension_numbers=(((2,), (2,)), ((0,), (0,))),
        preferred_element_type=jnp.float32) * (1.0 / 8.0)                 # (B, T, T)

    # Numerically-stable softmax over last axis; divide moved onto the (idle) EUP.
    m = jnp.max(scores, axis=-1, keepdims=True)
    e = jnp.exp(scores - m)
    denom = jnp.sum(e, axis=-1, keepdims=True)
    attn = e * pl.reciprocal(denom, approx=True)                          # (B, T, T)

    # weighted[b,t,:] = sum_s attn[b,t,s] * v[b,s,:]
    weighted = lax.dot_general(
        attn, v,
        dimension_numbers=(((2,), (1,)), ((0,), (0,))),
        preferred_element_type=jnp.float32)                               # (B, T, O)

    # Mean-pool over time, then one batched output projection for all B rows.
    pooled = jnp.sum(weighted, axis=1) * (1.0 / T)                        # (B, O)
    out = jnp.dot(pooled, wo_ref[...],
                  preferred_element_type=jnp.float32) + bo_ref[...]       # (B, O)

    out_ref[...] = out                                                    # single slab store


def self_attention_block(x, params, *, matmul_dtype=jnp.float32):
    """x: (B, T, D) float32 -> (B, 1, O) float32.

    matmul_dtype=jnp.bfloat16 is recommended on v6e/v7x (halves weight/activation
    DMA bytes, bf16 MXU at full rate; accumulation stays f32 via
    preferred_element_type).  Softmax / bias math stays f32 inside the kernel,
    which also keeps v5e happy (no bf16 VPU/EUP path there).
    """
    B, T, D = x.shape
    O = params["wo"].shape[1]

    # Fuse Q/K/V weights and biases: one (D, 3O) matmul instead of three (D, O).
    w_qkv = jnp.concatenate([params["wq"], params["wk"], params["wv"]], axis=1)  # (D, 3O)
    b_qkv = jnp.concatenate([params["bq"], params["bk"], params["bv"]], axis=1)  # (1, 3O)

    x_in = x.astype(matmul_dtype)
    w_qkv = w_qkv.astype(matmul_dtype)
    wo = params["wo"].astype(matmul_dtype)

    out2d = pl.pallas_call(
        _attn_kernel,
        out_shape=jax.ShapeDtypeStruct((B, O), jnp.float32),
        grid=(1,),  # single invocation: whole problem fits trivially in VMEM
        in_specs=[
            pl.BlockSpec((B, T, D), lambda i: (0, 0, 0)),    # x: one 8 KB DMA
            pl.BlockSpec((D, 3 * O), lambda i: (0, 0)),      # fused W_qkv
            pl.BlockSpec((1, 3 * O), lambda i: (0, 0)),      # fused b_qkv (VMEM, broadcast-add)
            pl.BlockSpec((O, O), lambda i: (0, 0)),          # W_out
            pl.BlockSpec((1, O), lambda i: (0, 0)),          # b_out
        ],
        out_specs=pl.BlockSpec((B, O), lambda i: (0, 0)),
    )(x_in, w_qkv, b_qkv, wo, params["bo"])

    return out2d[:, None, :]                                 # (B, 1, O)


def init_params(key, input_dim=32, output_dim=64):
    """Deterministic synthetic init, shapes matching nn.Linear(in, out).
    Weights stored as (in, out) i.e. PyTorch weight.T, so kernels do x @ W."""
    ks = jax.random.split(key, 8)
    scale_in = 1.0 / jnp.sqrt(input_dim)
    scale_out = 1.0 / jnp.sqrt(output_dim)
    return {
        "wq": jax.random.uniform(ks[0], (input_dim, output_dim), jnp.float32, -scale_in, scale_in),
        "bq": jax.random.uniform(ks[1], (1, output_dim), jnp.float32, -scale_in, scale_in),
        "wk": jax.random.uniform(ks[2], (input_dim, output_dim), jnp.float32, -scale_in, scale_in),
        "bk": jax.random.uniform(ks[3], (1, output_dim), jnp.float32, -scale_in, scale_in),
        "wv": jax.random.uniform(ks[4], (input_dim, output_dim), jnp.float32, -scale_in, scale_in),
        "bv": jax.random.uniform(ks[5], (1, output_dim), jnp.float32, -scale_in, scale_in),
        "wo": jax.random.uniform(ks[6], (output_dim, output_dim), jnp.float32, -scale_out, scale_out),
        "bo": jax.random.uniform(ks[7], (1, output_dim), jnp.float32, -scale_out, scale_out),
    }


def reference(x, p):
    """Pure-JAX reference of the PyTorch forward (for correctness check)."""
    q = x @ p["wq"] + p["bq"]
    k = x @ p["wk"] + p["bk"]
    v = x @ p["wv"] + p["bv"]
    s = jnp.einsum("btd,bsd->bts", q, k) / 8.0
    w = jax.nn.softmax(s, axis=-1)
    wv = jnp.einsum("bts,bsd->btd", w, v)
    pooled = jnp.mean(wv, axis=1, keepdims=True)
    return pooled @ p["wo"] + p["bo"]


if __name__ == "__main__":
    key = jax.random.PRNGKey(0)
    k_x, k_p = jax.random.split(key)

    B, T, D, O = 8, 8, 32, 64   # shapes implied by the module docstring
    x = jax.random.normal(k_x, (B, T, D), dtype=jnp.float32)
    params = init_params(k_p, input_dim=D, output_dim=O)

    out = self_attention_block(x, params)           # f32 matmuls for tight check
    out = jax.block_until_ready(out)

    ref = reference(x, params)
    assert out.shape == (B, 1, O), out.shape
    max_err = float(jnp.max(jnp.abs(out - ref)))
    # Slightly relaxed tolerance to absorb the approx (EUP) reciprocal in softmax.
    assert jnp.allclose(out, ref, atol=2e-3, rtol=2e-3), max_err

    print("KERNEL_OK")
</pallas_src>

<mosaic_0001>
module attributes {stable_mosaic.version = 11 : i64} {
  func.func @_attn_kernel(%arg0: i32, %arg1: memref<8x8x32xf32, #tpu.memory_space<vmem>>, %arg2: memref<32x192xf32, #tpu.memory_space<vmem>>, %arg3: memref<1x192xf32, #tpu.memory_space<vmem>>, %arg4: memref<64x64xf32, #tpu.memory_space<vmem>>, %arg5: memref<1x64xf32, #tpu.memory_space<vmem>>, %arg6: memref<8x64xf32, #tpu.memory_space<vmem>>) attributes {dimension_semantics = [#tpu.dimension_semantics<arbitrary>], iteration_bounds = array<i64: 1>, scalar_prefetch = 0 : i64, scratch_operands = 0 : i64, tpu.core_type = #tpu.core_type<tc>, window_params = [{pipeline_mode = #tpu.pipeline_mode<synchronous>, transform_indices = @transform_0, window_bounds = array<i64: 8, 8, 32>}, {pipeline_mode = #tpu.pipeline_mode<synchronous>, transform_indices = @transform_1, window_bounds = array<i64: 32, 192>}, {pipeline_mode = #tpu.pipeline_mode<synchronous>, transform_indices = @transform_2, window_bounds = array<i64: 1, 192>}, {pipeline_mode = #tpu.pipeline_mode<synchronous>, transform_indices = @transform_3, window_bounds = array<i64: 64, 64>}, {pipeline_mode = #tpu.pipeline_mode<synchronous>, transform_indices = @transform_4, window_bounds = array<i64: 1, 64>}, {pipeline_mode = #tpu.pipeline_mode<synchronous>, transform_indices = @transform_5, window_bounds = array<i64: 8, 64>}]} {
    %c0 = arith.constant 0 : index
    %c0_0 = arith.constant 0 : index
    %c0_1 = arith.constant 0 : index
    %0 = vector.load %arg1[%c0, %c0_0, %c0_1] : memref<8x8x32xf32, #tpu.memory_space<vmem>>, vector<8x8x32xf32>
    %1 = vector.shape_cast %0 : vector<8x8x32xf32> to vector<64x32xf32>
    %c0_2 = arith.constant 0 : index
    %c0_3 = arith.constant 0 : index
    %2 = vector.load %arg2[%c0_2, %c0_3] : memref<32x192xf32, #tpu.memory_space<vmem>>, vector<32x192xf32>
    %cst = arith.constant dense<0.000000e+00> : vector<64x192xf32>
    %3 = tpu.matmul %1, %2, %cst {dimension_numbers = #tpu.dot_dimension_numbers<[1], [0], [0], [1], [0, 0, 1, 1], [], []>} : vector<64x32xf32>, vector<32x192xf32>, vector<64x192xf32> -> vector<64x192xf32>
    %c0_4 = arith.constant 0 : index
    %c0_5 = arith.constant 0 : index
    %4 = vector.load %arg3[%c0_4, %c0_5] : memref<1x192xf32, #tpu.memory_space<vmem>>, vector<1x192xf32>
    %5 = vector.broadcast %4 : vector<1x192xf32> to vector<64x192xf32>
    %6 = arith.addf %3, %5 : vector<64x192xf32>
    %7 = vector.extract_strided_slice %6 {offsets = [0, 0], sizes = [64, 64], strides = [1, 1]} : vector<64x192xf32> to vector<64x64xf32>
    %8 = vector.shape_cast %7 : vector<64x64xf32> to vector<8x8x64xf32>
    %9 = vector.extract_strided_slice %6 {offsets = [0, 64], sizes = [64, 64], strides = [1, 1]} : vector<64x192xf32> to vector<64x64xf32>
    %10 = vector.shape_cast %9 : vector<64x64xf32> to vector<8x8x64xf32>
    %11 = vector.extract_strided_slice %6 {offsets = [0, 128], sizes = [64, 64], strides = [1, 1]} : vector<64x192xf32> to vector<64x64xf32>
    %12 = vector.shape_cast %11 : vector<64x64xf32> to vector<8x8x64xf32>
    %cst_6 = arith.constant dense<0.000000e+00> : vector<8x8x8xf32>
    %13 = tpu.matmul %8, %10, %cst_6 {dimension_numbers = #tpu.dot_dimension_numbers<[2], [2], [1], [1], [0, 0, 0, 1, 1, 1], [0], [0]>} : vector<8x8x64xf32>, vector<8x8x64xf32>, vector<8x8x8xf32> -> vector<8x8x8xf32>
    %cst_7 = arith.constant 1.250000e-01 : f32
    %14 = vector.broadcast %cst_7 : f32 to vector<8x8x8xf32>
    %15 = arith.mulf %13, %14 : vector<8x8x8xf32>
    %cst_8 = arith.constant dense<0xFF800000> : vector<8x8xf32>
    %16 = vector.multi_reduction <maximumf>, %15, %cst_8 [2] : vector<8x8x8xf32> to vector<8x8xf32>
    %17 = vector.shape_cast %16 : vector<8x8xf32> to vector<8x8x1xf32>
    %18 = vector.broadcast %17 : vector<8x8x1xf32> to vector<8x8x8xf32>
    %19 = arith.subf %15, %18 : vector<8x8x8xf32>
    %20 = math.exp %19 : vector<8x8x8xf32>
    %cst_9 = arith.constant dense<0.000000e+00> : vector<8x8xf32>
    %21 = vector.multi_reduction <add>, %20, %cst_9 [2] : vector<8x8x8xf32> to vector<8x8xf32>
    %22 = vector.shape_cast %21 : vector<8x8xf32> to vector<8x8x1xf32>
    %23 = tpu.reciprocal %22 {approx = true} : vector<8x8x1xf32> -> vector<8x8x1xf32>
    %24 = vector.broadcast %23 : vector<8x8x1xf32> to vector<8x8x8xf32>
    %25 = arith.mulf %20, %24 : vector<8x8x8xf32>
    %cst_10 = arith.constant dense<0.000000e+00> : vector<8x8x64xf32>
    %26 = tpu.matmul %25, %12, %cst_10 {dimension_numbers = #tpu.dot_dimension_numbers<[2], [1], [1], [2], [0, 0, 0, 1, 1, 2], [0], [0]>} : vector<8x8x8xf32>, vector<8x8x64xf32>, vector<8x8x64xf32> -> vector<8x8x64xf32>
    %cst_11 = arith.constant dense<0.000000e+00> : vector<8x64xf32>
    %27 = vector.multi_reduction <add>, %26, %cst_11 [1] : vector<8x8x64xf32> to vector<8x64xf32>
    %cst_12 = arith.constant 1.250000e-01 : f32
    %28 = vector.broadcast %cst_12 : f32 to vector<8x64xf32>
    %29 = arith.mulf %27, %28 : vector<8x64xf32>
    %c0_13 = arith.constant 0 : index
    %c0_14 = arith.constant 0 : index
    %30 = vector.load %arg4[%c0_13, %c0_14] : memref<64x64xf32, #tpu.memory_space<vmem>>, vector<64x64xf32>
    %cst_15 = arith.constant dense<0.000000e+00> : vector<8x64xf32>
    %31 = tpu.matmul %29, %30, %cst_15 {dimension_numbers = #tpu.dot_dimension_numbers<[1], [0], [0], [1], [0, 0, 1, 1], [], []>} : vector<8x64xf32>, vector<64x64xf32>, vector<8x64xf32> -> vector<8x64xf32>
    %c0_16 = arith.constant 0 : index
    %c0_17 = arith.constant 0 : index
    %32 = vector.load %arg5[%c0_16, %c0_17] : memref<1x64xf32, #tpu.memory_space<vmem>>, vector<1x64xf32>
    %33 = vector.broadcast %32 : vector<1x64xf32> to vector<8x64xf32>
    %34 = arith.addf %31, %33 : vector<8x64xf32>
    %c0_18 = arith.constant 0 : index
    %c0_19 = arith.constant 0 : index
    %35 = vector.load %arg6[%c0_18, %c0_19] : memref<8x64xf32, #tpu.memory_space<vmem>>, vector<8x64xf32>
    tpu.vector_store %arg6[%c0_18, %c0_19], %34 {strides = array<i32>} : memref<8x64xf32, #tpu.memory_space<vmem>>, vector<8x64xf32>,
    return
  }
  func.func @transform_0(%arg0: i32) -> (i32, i32, i32) {
    %c0_i32 = arith.constant 0 : i32
    %c0_i32_0 = arith.constant 0 : i32
    %c0_i32_1 = arith.constant 0 : i32
    %c0_i32_2 = arith.constant 0 : i32
    return %c0_i32, %c0_i32_0, %c0_i32_1 : i32, i32, i32
  }
  func.func @transform_1(%arg0: i32) -> (i32, i32) {
    %c0_i32 = arith.constant 0 : i32
    %c0_i32_0 = arith.constant 0 : i32
    %c0_i32_1 = arith.constant 0 : i32
    return %c0_i32, %c0_i32_0 : i32, i32
  }
  func.func @transform_2(%arg0: i32) -> (i32, i32) {
    %c0_i32 = arith.constant 0 : i32
    %c0_i32_0 = arith.constant 0 : i32
    %c0_i32_1 = arith.constant 0 : i32
    return %c0_i32, %c0_i32_0 : i32, i32
  }
  func.func @transform_3(%arg0: i32) -> (i32, i32) {
    %c0_i32 = arith.constant 0 : i32
    %c0_i32_0 = arith.constant 0 : i32
    %c0_i32_1 = arith.constant 0 : i32
    return %c0_i32, %c0_i32_0 : i32, i32
  }
  func.func @transform_4(%arg0: i32) -> (i32, i32) {
    %c0_i32 = arith.constant 0 : i32
    %c0_i32_0 = arith.constant 0 : i32
    %c0_i32_1 = arith.constant 0 : i32
    return %c0_i32, %c0_i32_0 : i32, i32
  }
  func.func @transform_5(%arg0: i32) -> (i32, i32) {
    %c0_i32 = arith.constant 0 : i32
    %c0_i32_0 = arith.constant 0 : i32
    %c0_i32_1 = arith.constant 0 : i32
    return %c0_i32, %c0_i32_0 : i32, i32
  }
}

</mosaic_0001>

<llo_original>
// kernel: tpu_custom_call.1
$region0: #{tpu_custom_call.1}
  #allocation0 [shape = 'u32[]', space=smem, size = 0x4, offset = 0x4, fixed_abs, tag = 'smem constant byte address 0x4 - core index']
  #allocation1 [shape = 'u32[144,128]{1,0:T(1,128)}', space=vmem, size = 0x12000, scoped, tag = 'internal scratch']
  %s0 = inlined_call_operand.hbm [shape: f32[8,8,32], index: 0, kind: input, shape index: {}]
  %s1 = inlined_call_operand.hbm [shape: f32[32,192], index: 1, kind: input, shape index: {}]
  %s2 = inlined_call_operand.vmem [shape: f32[1,192], index: 2, kind: input, shape index: {}]
  %s3 = inlined_call_operand.hbm [shape: f32[64,64], index: 3, kind: input, shape index: {}]
  %s4 = inlined_call_operand.vmem [shape: f32[1,64], index: 4, kind: input, shape index: {}]
  %s5 = inlined_call_operand.hbm [shape: f32[8,64], index: 5, kind: output, shape index: {}]
  %s6 = sld [smem:[#allocation0]]
  $region42: #{tpu_custom_call.1} parent=0
    _
  %s8 = ssub.s32 1, %s6
  %s9 = scalar_select 0, %s8, %s6
  $region1: #{tpu_custom_call.1} parent=0
    #allocation2 [shape = 'u8[32768]{0}', space=vmem, size = 0x8000, scoped, tag = 'input window, operand 0, single buffered']
    #allocation3 [shape = 's32[1]{0}', space=sflag, size = 0x4, scoped, tag = 'scoped memory for tpu_custom_call.1']
    #allocation4 [shape = 's32[1]{0}', space=sflag, size = 0x4, scoped, tag = 'scoped memory for tpu_custom_call.1']
    #allocation5 [shape = 'u8[32768]{0}', space=vmem, size = 0x8000, scoped, tag = 'input window, operand 1, single buffered']
    #allocation6 [shape = 's32[1]{0}', space=sflag, size = 0x4, scoped, tag = 'scoped memory for tpu_custom_call.1']
    #allocation7 [shape = 'u8[32768]{0}', space=vmem, size = 0x8000, scoped, tag = 'input window, operand 3, single buffered']
    #allocation8 [shape = 'u8[4096]{0}', space=vmem, size = 0x1000, scoped, tag = 'output window, operand 0, single buffered']
    %10 = vsyncpa [#allocation3], 0
    %11 = vsyncpa [#allocation6], 0
    %12 = vsyncpa [#allocation4], 0
    // Predicated region
    $region2: #{tpu_custom_call.1} parent=1 // pred_check
      _
    $region3: #{tpu_custom_call.1} parent=1 // pred_check_branch
      %14 = sbr.rel (0) target = $region5
    $region4: #{tpu_custom_call.1} parent=1 // pred_region
      %s16 = ssub.s32 1024, 1024
      %17 = vsyncadd [#allocation3], %s16
      %s18 = sshll.u32 [#allocation2], 4
      %s19 = int_to_ptr.vmem [resolvable:$true] %s18
      %24 = dma.hbm_to_vmem [thread:$0]  %s0, 1024, %s19, [#allocation3], 128, 128, 8
    $region5: #{tpu_custom_call.1} parent=1 // pred_fallthru
      _
    // Predicated region
    $region6: #{tpu_custom_call.1} parent=1 // pred_check
      _
    $region7: #{tpu_custom_call.1} parent=1 // pred_check_branch
      %26 = sbr.rel (0) target = $region9
    $region8: #{tpu_custom_call.1} parent=1 // pred_region
      %s28 = ssub.s32 1024, 1024
      %29 = vsyncadd [#allocation6], %s28
      %s30 = sshll.u32 [#allocation5], 4
      %s31 = int_to_ptr.vmem [resolvable:$true] %s30
      %36 = dma.hbm_to_vmem [thread:$0]  %s1, 1024, %s31, [#allocation6], 256, 256, 16
    $region9: #{tpu_custom_call.1} parent=1 // pred_fallthru
      _
    // Predicated region
    $region10: #{tpu_custom_call.1} parent=1 // pred_check
      _
    $region11: #{tpu_custom_call.1} parent=1 // pred_check_branch
      %38 = sbr.rel (0) target = $region13
    $region12: #{tpu_custom_call.1} parent=1 // pred_region
      _
    $region13: #{tpu_custom_call.1} parent=1 // pred_fallthru
      _
    // Predicated region
    $region14: #{tpu_custom_call.1} parent=1 // pred_check
      _
    $region15: #{tpu_custom_call.1} parent=1 // pred_check_branch
      %40 = sbr.rel (0) target = $region17
    $region16: #{tpu_custom_call.1} parent=1 // pred_region
      %s42 = ssub.s32 1024, 1024
      %43 = vsyncadd [#allocation6], %s42
      %s44 = sshll.u32 [#allocation7], 4
      %s45 = int_to_ptr.vmem [resolvable:$true] %s44
      %50 = dma.hbm_to_vmem [thread:$0]  %s3, 1024, %s45, [#allocation6], 128, 128, 8
    $region17: #{tpu_custom_call.1} parent=1 // pred_fallthru
      _
    // Predicated region
    $region18: #{tpu_custom_call.1} parent=1 // pred_check
      _
    $region19: #{tpu_custom_call.1} parent=1 // pred_check_branch
      %52 = sbr.rel (0) target = $region21
    $region20: #{tpu_custom_call.1} parent=1 // pred_region
      _
    $region21: #{tpu_custom_call.1} parent=1 // pred_fallthru
      _
    // Predicated region
    $region22: #{tpu_custom_call.1} parent=1 // pred_check
      _
    $region23: #{tpu_custom_call.1} parent=1 // pred_check_branch
      %54 = sbr.rel (0) target = $region25
    $region24: #{tpu_custom_call.1} parent=1 // pred_region
      %55 = dma.done [#allocation3], 1024
    $region25: #{tpu_custom_call.1} parent=1 // pred_fallthru
      _
    // Predicated region
    $region26: #{tpu_custom_call.1} parent=1 // pred_check
      _
    $region27: #{tpu_custom_call.1} parent=1 // pred_check_branch
      %57 = sbr.rel (0) target = $region29
    $region28: #{tpu_custom_call.1} parent=1 // pred_region
      %58 = dma.done [#allocation6], 1024
    $region29: #{tpu_custom_call.1} parent=1 // pred_fallthru
      _
    // Predicated region
    $region30: #{tpu_custom_call.1} parent=1 // pred_check
      _
    $region31: #{tpu_custom_call.1} parent=1 // pred_check_branch
      %60 = sbr.rel (0) target = $region33
    $region32: #{tpu_custom_call.1} parent=1 // pred_region
      %61 = dma.done [#allocation6], 1024
    $region33: #{tpu_custom_call.1} parent=1 // pred_fallthru
      _
    %v62 = vld [vmem:[#allocation2] sm:$0xff]
    %v63 = vld [vmem:[#allocation2 + $0x8] sm:$0xff]
    %v64 = vld [vmem:[#allocation2 + $0x10] sm:$0xff]
    %v65 = vld [vmem:[#allocation2 + $0x18] sm:$0xff]
    %v66 = vld [vmem:[#allocation2 + $0x20] sm:$0xff]
    %v67 = vld [vmem:[#allocation2 + $0x28] sm:$0xff]
    %v68 = vld [vmem:[#allocation2 + $0x30] sm:$0xff]
    %v69 = vld [vmem:[#allocation2 + $0x38] sm:$0xff]
    %v70 = vld [vmem:[#allocation5] sm:$0xff]
    %v71 = vld [vmem:[#allocation5 + $0x8] sm:$0xff]
    %v72 = vld [vmem:[#allocation5 + $0x10] sm:$0xff]
    %v73 = vld [vmem:[#allocation5 + $0x18] sm:$0xff]
    %v74 = vld [vmem:[#allocation5 + $0x20] sm:$0xff]
    %v75 = vld [vmem:[#allocation5 + $0x28] sm:$0xff]
    %v76 = vld [vmem:[#allocation5 + $0x30] sm:$0xff]
    %v77 = vld [vmem:[#allocation5 + $0x38] sm:$0xff]
    %v78 = vld [vmem:[%s2] sm:$0x3]
    %v80 = vlaneseq
    %v81 = vshrl.u32 %v80, 7
    %v82 = vsub.s32 0, %v81
    %v83 = vrot.slane %v78, %v82
    %v84 = vlaneseq
    %v85 = vshrl.u32 %v84, 7
    %v86 = vsub.s32 1, %v85
    %v87 = vrot.slane %v78, %v86
    %vm90 = vcmask 261120
    %v92 = vsel %vm90, %v62, 0
    %v95 = vsel %vm90, %v63, 0
    %v98 = vsel %vm90, %v64, 0
    %v101 = vsel %vm90, %v65, 0
    %v104 = vsel %vm90, %v66, 0
    %v107 = vsel %vm90, %v67, 0
    %v110 = vsel %vm90, %v68, 0
    %v113 = vsel %vm90, %v69, 0
    %115 = vmatprep.subr.mxu0 0.0
    %116 = vmatpush1.msra.mxu0 0.0
    %117 = vmatprep.subr.mxu0 0.0
    %118 = vmatpush1.msra.mxu0 0.0
    %119 = vmatprep.subr.mxu0 0.0
    %120 = vmatpush1.msra.mxu0 0.0
    %121 = vmatprep.subr.mxu0 0.0
    %122 = vmatpush1.msra.mxu0 0.0
    %123 = vmatprep.subr.mxu0 0.0
    %124 = vmatpush1.msra.mxu0 0.0
    %125 = vmatprep.subr.mxu0 0.0
    %126 = vmatpush1.msra.mxu0 0.0
    %127 = vmatprep.subr.mxu0 0.0
    %128 = vmatpush1.msra.mxu0 0.0
    %129 = vmatprep.subr.mxu0 0.0
    %130 = vmatpush1.msra.mxu0 0.0
    %131 = vmatprep.subr.mxu0 0.0
    %132 = vmatpush1.msra.mxu0 0.0
    %133 = vmatprep.subr.mxu0 0.0
    %134 = vmatpush1.msra.mxu0 0.0
    %135 = vmatprep.subr.mxu0 0.0
    %136 = vmatpush1.msra.mxu0 0.0
    %137 = vmatprep.subr.mxu0 0.0
    %138 = vmatpush1.msra.mxu0 0.0
    %139 = vmatprep.subr.mxu0 %v77
    %140 = vmatpush1.msra.mxu0 %v76
    %141 = vmatprep.subr.mxu0 %v75
    %142 = vmatpush1.msra.mxu0 %v74
    %143 = vmatprep.subr.mxu0 %v73
    %144 = vmatpush1.msra.mxu0 %v72
    %145 = vmatprep.subr.mxu0 %v71
    %146 = vmatpush1.msra.mxu0 %v70
    %147 = vmatprep.subr.mxu0 0.0
    %148 = vmatpush2.msra.mxu0 0.0
    %149 = vmatprep.subr.mxu0 0.0
    %150 = vmatpush2.msra.mxu0 0.0
    %151 = vmatprep.subr.mxu0 0.0
    %152 = vmatpush2.msra.mxu0 0.0
    %153 = vmatprep.subr.mxu0 0.0
    %154 = vmatpush2.msra.mxu0 0.0
    %155 = vmatprep.subr.mxu0 0.0
    %156 = vmatpush2.msra.mxu0 0.0
    %157 = vmatprep.subr.mxu0 0.0
    %158 = vmatpush2.msra.mxu0 0.0
    %159 = vmatprep.subr.mxu0 0.0
    %160 = vmatpush2.msra.mxu0 0.0
    %161 = vmatprep.subr.mxu0 0.0
    %162 = vmatpush2.msra.mxu0 0.0
    %163 = vmatprep.subr.mxu0 0.0
    %164 = vmatpush2.msra.mxu0 0.0
    %165 = vmatprep.subr.mxu0 0.0
    %166 = vmatpush2.msra.mxu0 0.0
    %167 = vmatprep.subr.mxu0 0.0
    %168 = vmatpush2.msra.mxu0 0.0
    %169 = vmatprep.subr.mxu0 0.0
    %170 = vmatpush2.msra.mxu0 0.0
    %171 = vmatprep.subr.mxu0 0.0
    %172 = vmatpush2.msra.mxu0 0.0
    %173 = vmatprep.subr.mxu0 0.0
    %174 = vmatpush2.msra.mxu0 0.0
    %175 = vmatprep.subr.mxu0 0.0
    %176 = vmatpush2.msra.mxu0 0.0
    %177 = vmatprep.subr.mxu0 0.0
    %178 = vmatpush2.msra.mxu0 0.0
    %179 = vmatprep.mubr.f32.mxu0 0.0
    %180 = vmatmul.mubr.f32.gmra.mxu0 %v92
    %v181 = vpop.f32.mrf.mxu0
    %v182 = vadd.f32 %v83, %v181
    %v183 = vpop.f32.mrf.mxu0
    %v184 = vadd.f32 %v87, %v183
    %185 = vmatprep.mubr.f32.mxu0 0.0
    %186 = vmatmul.mubr.f32.gmra.mxu0 %v95
    %v187 = vpop.f32.mrf.mxu0
    %v188 = vadd.f32 %v83, %v187
    %v189 = vpop.f32.mrf.mxu0
    %v190 = vadd.f32 %v87, %v189
    %191 = vmatprep.mubr.f32.mxu0 0.0
    %192 = vmatmul.mubr.f32.gmra.mxu0 %v98
    %v193 = vpop.f32.mrf.mxu0
    %v194 = vadd.f32 %v83, %v193
    %v195 = vpop.f32.mrf.mxu0
    %v196 = vadd.f32 %v87, %v195
    %197 = vmatprep.mubr.f32.mxu0 0.0
    %198 = vmatmul.mubr.f32.gmra.mxu0 %v101
    %v199 = vpop.f32.mrf.mxu0
    %v200 = vadd.f32 %v83, %v199
    %v201 = vpop.f32.mrf.mxu0
    %v202 = vadd.f32 %v87, %v201
    %203 = vmatprep.mubr.f32.mxu0 0.0
    %204 = vmatmul.mubr.f32.gmra.mxu0 %v104
    %v205 = vpop.f32.mrf.mxu0
    %v206 = vadd.f32 %v83, %v205
    %v207 = vpop.f32.mrf.mxu0
    %v208 = vadd.f32 %v87, %v207
    %209 = vmatprep.mubr.f32.mxu0 0.0
    %210 = vmatmul.mubr.f32.gmra.mxu0 %v107
    %v211 = vpop.f32.mrf.mxu0
    %v212 = vadd.f32 %v83, %v211
    %v213 = vpop.f32.mrf.mxu0
    %v214 = vadd.f32 %v87, %v213
    %215 = vmatprep.mubr.f32.mxu0 0.0
    %216 = vmatmul.mubr.f32.gmra.mxu0 %v110
    %v217 = vpop.f32.mrf.mxu0
    %v218 = vadd.f32 %v83, %v217
    %v219 = vpop.f32.mrf.mxu0
    %v220 = vadd.f32 %v87, %v219
    %221 = vmatprep.mubr.f32.mxu0 0.0
    %222 = vmatmul.mubr.f32.gmra.mxu0 %v113
    %v223 = vpop.f32.mrf.mxu0
    %v224 = vadd.f32 %v83, %v223
    %v225 = vpop.f32.mrf.mxu0
    %v226 = vadd.f32 %v87, %v225
    %227 = vdwg.mxu0
    %229 = vrot.lane.b32.xlu0 %v182, 64
    %v230 = vpop.permute.xlu0 %229
    %vm231 = vcmask 523264
    %v232 = vsel %vm231, %v182, 0
    %v234 = vsel %vm231, %v230, 0
    %236 = vmatprep.subr.mxu0 0.0
    %237 = vmatpush1.xpose.msra.mxu0 0.0
    %238 = vmatprep.subr.mxu0 0.0
    %239 = vmatpush1.xpose.msra.mxu0 0.0
    %240 = vmatprep.subr.mxu0 0.0
    %241 = vmatpush1.xpose.msra.mxu0 0.0
    %242 = vmatprep.subr.mxu0 0.0
    %243 = vmatpush1.xpose.msra.mxu0 0.0
    %244 = vmatprep.subr.mxu0 0.0
    %245 = vmatpush1.xpose.msra.mxu0 0.0
    %246 = vmatprep.subr.mxu0 0.0
    %247 = vmatpush1.xpose.msra.mxu0 0.0
    %248 = vmatprep.subr.mxu0 0.0
    %249 = vmatpush1.xpose.msra.mxu0 0.0
    %250 = vmatprep.subr.mxu0 0.0
    %251 = vmatpush1.xpose.msra.mxu0 0.0
    %252 = vmatprep.subr.mxu0 0.0
    %253 = vmatpush1.xpose.msra.mxu0 0.0
    %254 = vmatprep.subr.mxu0 0.0
    %255 = vmatpush1.xpose.msra.mxu0 0.0
    %256 = vmatprep.subr.mxu0 0.0
    %257 = vmatpush1.xpose.msra.mxu0 0.0
    %258 = vmatprep.subr.mxu0 0.0
    %259 = vmatpush1.xpose.msra.mxu0 0.0
    %260 = vmatprep.subr.mxu0 0.0
    %261 = vmatpush1.xpose.msra.mxu0 0.0
    %262 = vmatprep.subr.mxu0 0.0
    %263 = vmatpush1.xpose.msra.mxu0 0.0
    %264 = vmatprep.subr.mxu0 0.0
    %265 = vmatpush1.xpose.msra.mxu0 0.0
    %266 = vmatprep.subr.mxu0 0.0
    %267 = vmatpush1.xpose.msra.mxu0 %v234
    %268 = vmatprep.subr.mxu0 0.0
    %269 = vmatpush2.xpose.msra.mxu0 0.0
    %270 = vmatprep.subr.mxu0 0.0
    %271 = vmatpush2.xpose.msra.mxu0 0.0
    %272 = vmatprep.subr.mxu0 0.0
    %273 = vmatpush2.xpose.msra.mxu0 0.0
    %274 = vmatprep.subr.mxu0 0.0
    %275 = vmatpush2.xpose.msra.mxu0 0.0
    %276 = vmatprep.subr.mxu0 0.0
    %277 = vmatpush2.xpose.msra.mxu0 0.0
    %278 = vmatprep.subr.mxu0 0.0
    %279 = vmatpush2.xpose.msra.mxu0 0.0
    %280 = vmatprep.subr.mxu0 0.0
    %281 = vmatpush2.xpose.msra.mxu0 0.0
    %282 = vmatprep.subr.mxu0 0.0
    %283 = vmatpush2.xpose.msra.mxu0 0.0
    %284 = vmatprep.subr.mxu0 0.0
    %285 = vmatpush2.xpose.msra.mxu0 0.0
    %286 = vmatprep.subr.mxu0 0.0
    %287 = vmatpush2.xpose.msra.mxu0 0.0
    %288 = vmatprep.subr.mxu0 0.0
    %289 = vmatpush2.xpose.msra.mxu0 0.0
    %290 = vmatprep.subr.mxu0 0.0
    %291 = vmatpush2.xpose.msra.mxu0 0.0
    %292 = vmatprep.subr.mxu0 0.0
    %293 = vmatpush2.xpose.msra.mxu0 0.0
    %294 = vmatprep.subr.mxu0 0.0
    %295 = vmatpush2.xpose.msra.mxu0 0.0
    %296 = vmatprep.subr.mxu0 0.0
    %297 = vmatpush2.xpose.msra.mxu0 0.0
    %298 = vmatprep.subr.mxu0 0.0
    %299 = vmatpush2.xpose.msra.mxu0 0.0
    %300 = vmatprep.mubr.f32.mxu0 0.0
    %301 = vmatmul.mubr.f32.gmra.mxu0 %v232
    %v302 = vpop.f32.mrf.mxu0
    %v303 = vadd.f32 0.0, %v302
    %v304 = vpop.f32.mrf.mxu0
    %305 = vdwg.mxu0
    %307 = vrot.lane.b32.xlu0 %v188, 64
    %v308 = vpop.permute.xlu0 %307
    %v309 = vsel %vm231, %v188, 0
    %v311 = vsel %vm231, %v308, 0
    %313 = vmatprep.subr.mxu0 0.0
    %314 = vmatpush1.xpose.msra.mxu0 0.0
    %315 = vmatprep.subr.mxu0 0.0
    %316 = vmatpush1.xpose.msra.mxu0 0.0
    %317 = vmatprep.subr.mxu0 0.0
    %318 = vmatpush1.xpose.msra.mxu0 0.0
    %319 = vmatprep.subr.mxu0 0.0
    %320 = vmatpush1.xpose.msra.mxu0 0.0
    %321 = vmatprep.subr.mxu0 0.0
    %322 = vmatpush1.xpose.msra.mxu0 0.0
    %323 = vmatprep.subr.mxu0 0.0
    %324 = vmatpush1.xpose.msra.mxu0 0.0
    %325 = vmatprep.subr.mxu0 0.0
    %326 = vmatpush1.xpose.msra.mxu0 0.0
    %327 = vmatprep.subr.mxu0 0.0
    %328 = vmatpush1.xpose.msra.mxu0 0.0
    %329 = vmatprep.subr.mxu0 0.0
    %330 = vmatpush1.xpose.msra.mxu0 0.0
    %331 = vmatprep.subr.mxu0 0.0
    %332 = vmatpush1.xpose.msra.mxu0 0.0
    %333 = vmatprep.subr.mxu0 0.0
    %334 = vmatpush1.xpose.msra.mxu0 0.0
    %335 = vmatprep.subr.mxu0 0.0
    %336 = vmatpush1.xpose.msra.mxu0 0.0
    %337 = vmatprep.subr.mxu0 0.0
    %338 = vmatpush1.xpose.msra.mxu0 0.0
    %339 = vmatprep.subr.mxu0 0.0
    %340 = vmatpush1.xpose.msra.mxu0 0.0
    %341 = vmatprep.subr.mxu0 0.0
    %342 = vmatpush1.xpose.msra.mxu0 0.0
    %343 = vmatprep.subr.mxu0 0.0
    %344 = vmatpush1.xpose.msra.mxu0 %v311
    %345 = vmatprep.subr.mxu0 0.0
    %346 = vmatpush2.xpose.msra.mxu0 0.0
    %347 = vmatprep.subr.mxu0 0.0
    %348 = vmatpush2.xpose.msra.mxu0 0.0
    %349 = vmatprep.subr.mxu0 0.0
    %350 = vmatpush2.xpose.msra.mxu0 0.0
    %351 = vmatprep.subr.mxu0 0.0
    %352 = vmatpush2.xpose.msra.mxu0 0.0
    %353 = vmatprep.subr.mxu0 0.0
    %354 = vmatpush2.xpose.msra.mxu0 0.0
    %355 = vmatprep.subr.mxu0 0.0
    %356 = vmatpush2.xpose.msra.mxu0 0.0
    %357 = vmatprep.subr.mxu0 0.0
    %358 = vmatpush2.xpose.msra.mxu0 0.0
    %359 = vmatprep.subr.mxu0 0.0
    %360 = vmatpush2.xpose.msra.mxu0 0.0
    %361 = vmatprep.subr.mxu0 0.0
    %362 = vmatpush2.xpose.msra.mxu0 0.0
    %363 = vmatprep.subr.mxu0 0.0
    %364 = vmatpush2.xpose.msra.mxu0 0.0
    %365 = vmatprep.subr.mxu0 0.0
    %366 = vmatpush2.xpose.msra.mxu0 0.0
    %367 = vmatprep.subr.mxu0 0.0
    %368 = vmatpush2.xpose.msra.mxu0 0.0
    %369 = vmatprep.subr.mxu0 0.0
    %370 = vmatpush2.xpose.msra.mxu0 0.0
    %371 = vmatprep.subr.mxu0 0.0
    %372 = vmatpush2.xpose.msra.mxu0 0.0
    %373 = vmatprep.subr.mxu0 0.0
    %374 = vmatpush2.xpose.msra.mxu0 0.0
    %375 = vmatprep.subr.mxu0 0.0
    %376 = vmatpush2.xpose.msra.mxu0 0.0
    %377 = vmatprep.mubr.f32.mxu0 0.0
    %378 = vmatmul.mubr.f32.gmra.mxu0 %v309
    %v379 = vpop.f32.mrf.mxu0
    %v380 = vadd.f32 0.0, %v379
    %v381 = vpop.f32.mrf.mxu0
    %382 = vdwg.mxu0
    %384 = vrot.lane.b32.xlu0 %v194, 64
    %v385 = vpop.permute.xlu0 %384
    %v386 = vsel %vm231, %v194, 0
    %v388 = vsel %vm231, %v385, 0
    %390 = vmatprep.subr.mxu0 0.0
    %391 = vmatpush1.xpose.msra.mxu0 0.0
    %392 = vmatprep.subr.mxu0 0.0
    %393 = vmatpush1.xpose.msra.mxu0 0.0
    %394 = vmatprep.subr.mxu0 0.0
    %395 = vmatpush1.xpose.msra.mxu0 0.0
    %396 = vmatprep.subr.mxu0 0.0
    %397 = vmatpush1.xpose.msra.mxu0 0.0
    %398 = vmatprep.subr.mxu0 0.0
    %399 = vmatpush1.xpose.msra.mxu0 0.0
    %400 = vmatprep.subr.mxu0 0.0
    %401 = vmatpush1.xpose.msra.mxu0 0.0
    %402 = vmatprep.subr.mxu0 0.0
    %403 = vmatpush1.xpose.msra.mxu0 0.0
    %404 = vmatprep.subr.mxu0 0.0
    %405 = vmatpush1.xpose.msra.mxu0 0.0
    %406 = vmatprep.subr.mxu0 0.0
    %407 = vmatpush1.xpose.msra.mxu0 0.0
    %408 = vmatprep.subr.mxu0 0.0
    %409 = vmatpush1.xpose.msra.mxu0 0.0
    %410 = vmatprep.subr.mxu0 0.0
    %411 = vmatpush1.xpose.msra.mxu0 0.0
    %412 = vmatprep.subr.mxu0 0.0
    %413 = vmatpush1.xpose.msra.mxu0 0.0
    %414 = vmatprep.subr.mxu0 0.0
    %415 = vmatpush1.xpose.msra.mxu0 0.0
    %416 = vmatprep.subr.mxu0 0.0
    %417 = vmatpush1.xpose.msra.mxu0 0.0
    %418 = vmatprep.subr.mxu0 0.0
    %419 = vmatpush1.xpose.msra.mxu0 0.0
    %420 = vmatprep.subr.mxu0 0.0
    %421 = vmatpush1.xpose.msra.mxu0 %v388
    %422 = vmatprep.subr.mxu0 0.0
    %423 = vmatpush2.xpose.msra.mxu0 0.0
    %424 = vmatprep.subr.mxu0 0.0
    %425 = vmatpush2.xpose.msra.mxu0 0.0
    %426 = vmatprep.subr.mxu0 0.0
    %427 = vmatpush2.xpose.msra.mxu0 0.0
    %428 = vmatprep.subr.mxu0 0.0
    %429 = vmatpush2.xpose.msra.mxu0 0.0
    %430 = vmatprep.subr.mxu0 0.0
    %431 = vmatpush2.xpose.msra.mxu0 0.0
    %432 = vmatprep.subr.mxu0 0.0
    %433 = vmatpush2.xpose.msra.mxu0 0.0
    %434 = vmatprep.subr.mxu0 0.0
    %435 = vmatpush2.xpose.msra.mxu0 0.0
    %436 = vmatprep.subr.mxu0 0.0
    %437 = vmatpush2.xpose.msra.mxu0 0.0
    %438 = vmatprep.subr.mxu0 0.0
    %439 = vmatpush2.xpose.msra.mxu0 0.0
    %440 = vmatprep.subr.mxu0 0.0
    %441 = vmatpush2.xpose.msra.mxu0 0.0
    %442 = vmatprep.subr.mxu0 0.0
    %443 = vmatpush2.xpose.msra.mxu0 0.0
    %444 = vmatprep.subr.mxu0 0.0
    %445 = vmatpush2.xpose.msra.mxu0 0.0
    %446 = vmatprep.subr.mxu0 0.0
    %447 = vmatpush2.xpose.msra.mxu0 0.0
    %448 = vmatprep.subr.mxu0 0.0
    %449 = vmatpush2.xpose.msra.mxu0 0.0
    %450 = vmatprep.subr.mxu0 0.0
    %451 = vmatpush2.xpose.msra.mxu0 0.0
    %452 = vmatprep.subr.mxu0 0.0
    %453 = vmatpush2.xpose.msra.mxu0 0.0
    %454 = vmatprep.mubr.f32.mxu0 0.0
    %455 = vmatmul.mubr.f32.gmra.mxu0 %v386
    %v456 = vpop.f32.mrf.mxu0
    %v457 = vadd.f32 0.0, %v456
    %v458 = vpop.f32.mrf.mxu0
    %459 = vdwg.mxu0
    %461 = vrot.lane.b32.xlu0 %v200, 64
    %v462 = vpop.permute.xlu0 %461
    %v463 = vsel %vm231, %v200, 0
    %v465 = vsel %vm231, %v462, 0
    %467 = vmatprep.subr.mxu0 0.0
    %468 = vmatpush1.xpose.msra.mxu0 0.0
    %469 = vmatprep.subr.mxu0 0.0
    %470 = vmatpush1.xpose.msra.mxu0 0.0
    %471 = vmatprep.subr.mxu0 0.0
    %472 = vmatpush1.xpose.msra.mxu0 0.0
    %473 = vmatprep.subr.mxu0 0.0
    %474 = vmatpush1.xpose.msra.mxu0 0.0
    %475 = vmatprep.subr.mxu0 0.0
    %476 = vmatpush1.xpose.msra.mxu0 0.0
    %477 = vmatprep.subr.mxu0 0.0
    %478 = vmatpush1.xpose.msra.mxu0 0.0
    %479 = vmatprep.subr.mxu0 0.0
    %480 = vmatpush1.xpose.msra.mxu0 0.0
    %481 = vmatprep.subr.mxu0 0.0
    %482 = vmatpush1.xpose.msra.mxu0 0.0
    %483 = vmatprep.subr.mxu0 0.0
    %484 = vmatpush1.xpose.msra.mxu0 0.0
    %485 = vmatprep.subr.mxu0 0.0
    %486 = vmatpush1.xpose.msra.mxu0 0.0
    %487 = vmatprep.subr.mxu0 0.0
    %488 = vmatpush1.xpose.msra.mxu0 0.0
    %489 = vmatprep.subr.mxu0 0.0
    %490 = vmatpush1.xpose.msra.mxu0 0.0
    %491 = vmatprep.subr.mxu0 0.0
    %492 = vmatpush1.xpose.msra.mxu0 0.0
    %493 = vmatprep.subr.mxu0 0.0
    %494 = vmatpush1.xpose.msra.mxu0 0.0
    %495 = vmatprep.subr.mxu0 0.0
    %496 = vmatpush1.xpose.msra.mxu0 0.0
    %497 = vmatprep.subr.mxu0 0.0
    %498 = vmatpush1.xpose.msra.mxu0 %v465
    %499 = vmatprep.subr.mxu0 0.0
    %500 = vmatpush2.xpose.msra.mxu0 0.0
    %501 = vmatprep.subr.mxu0 0.0
    %502 = vmatpush2.xpose.msra.mxu0 0.0
    %503 = vmatprep.subr.mxu0 0.0
    %504 = vmatpush2.xpose.msra.mxu0 0.0
    %505 = vmatprep.subr.mxu0 0.0
    %506 = vmatpush2.xpose.msra.mxu0 0.0
    %507 = vmatprep.subr.mxu0 0.0
    %508 = vmatpush2.xpose.msra.mxu0 0.0
    %509 = vmatprep.subr.mxu0 0.0
    %510 = vmatpush2.xpose.msra.mxu0 0.0
    %511 = vmatprep.subr.mxu0 0.0
    %512 = vmatpush2.xpose.msra.mxu0 0.0
    %513 = vmatprep.subr.mxu0 0.0
    %514 = vmatpush2.xpose.msra.mxu0 0.0
    %515 = vmatprep.subr.mxu0 0.0
    %516 = vmatpush2.xpose.msra.mxu0 0.0
    %517 = vmatprep.subr.mxu0 0.0
    %518 = vmatpush2.xpose.msra.mxu0 0.0
    %519 = vmatprep.subr.mxu0 0.0
    %520 = vmatpush2.xpose.msra.mxu0 0.0
    %521 = vmatprep.subr.mxu0 0.0
    %522 = vmatpush2.xpose.msra.mxu0 0.0
    %523 = vmatprep.subr.mxu0 0.0
    %524 = vmatpush2.xpose.msra.mxu0 0.0
    %525 = vmatprep.subr.mxu0 0.0
    %526 = vmatpush2.xpose.msra.mxu0 0.0
    %527 = vmatprep.subr.mxu0 0.0
    %528 = vmatpush2.xpose.msra.mxu0 0.0
    %529 = vmatprep.subr.mxu0 0.0
    %530 = vmatpush2.xpose.msra.mxu0 0.0
    %531 = vmatprep.mubr.f32.mxu0 0.0
    %532 = vmatmul.mubr.f32.gmra.mxu0 %v463
    %v533 = vpop.f32.mrf.mxu0
    %v534 = vadd.f32 0.0, %v533
    %v535 = vpop.f32.mrf.mxu0
    %536 = vdwg.mxu0
    %538 = vrot.lane.b32.xlu0 %v206, 64
    %v539 = vpop.permute.xlu0 %538
    %v540 = vsel %vm231, %v206, 0
    %v542 = vsel %vm231, %v539, 0
    %544 = vmatprep.subr.mxu0 0.0
    %545 = vmatpush1.xpose.msra.mxu0 0.0
    %546 = vmatprep.subr.mxu0 0.0
    %547 = vmatpush1.xpose.msra.mxu0 0.0
    %548 = vmatprep.subr.mxu0 0.0
    %549 = vmatpush1.xpose.msra.mxu0 0.0
    %550 = vmatprep.subr.mxu0 0.0
    %551 = vmatpush1.xpose.msra.mxu0 0.0
    %552 = vmatprep.subr.mxu0 0.0
    %553 = vmatpush1.xpose.msra.mxu0 0.0
    %554 = vmatprep.subr.mxu0 0.0
    %555 = vmatpush1.xpose.msra.mxu0 0.0
    %556 = vmatprep.subr.mxu0 0.0
    %557 = vmatpush1.xpose.msra.mxu0 0.0
    %558 = vmatprep.subr.mxu0 0.0
    %559 = vmatpush1.xpose.msra.mxu0 0.0
    %560 = vmatprep.subr.mxu0 0.0
    %561 = vmatpush1.xpose.msra.mxu0 0.0
    %562 = vmatprep.subr.mxu0 0.0
    %563 = vmatpush1.xpose.msra.mxu0 0.0
    %564 = vmatprep.subr.mxu0 0.0
    %565 = vmatpush1.xpose.msra.mxu0 0.0
    %566 = vmatprep.subr.mxu0 0.0
    %567 = vmatpush1.xpose.msra.mxu0 0.0
    %568 = vmatprep.subr.mxu0 0.0
    %569 = vmatpush1.xpose.msra.mxu0 0.0
    %570 = vmatprep.subr.mxu0 0.0
    %571 = vmatpush1.xpose.msra.mxu0 0.0
    %572 = vmatprep.subr.mxu0 0.0
    %573 = vmatpush1.xpose.msra.mxu0 0.0
    %574 = vmatprep.subr.mxu0 0.0
    %575 = vmatpush1.xpose.msra.mxu0 %v542
    %576 = vmatprep.subr.mxu0 0.0
    %577 = vmatpush2.xpose.msra.mxu0 0.0
    %578 = vmatprep.subr.mxu0 0.0
    %579 = vmatpush2.xpose.msra.mxu0 0.0
    %580 = vmatprep.subr.mxu0 0.0
    %581 = vmatpush2.xpose.msra.mxu0 0.0
    %582 = vmatprep.subr.mxu0 0.0
    %583 = vmatpush2.xpose.msra.mxu0 0.0
    %584 = vmatprep.subr.mxu0 0.0
    %585 = vmatpush2.xpose.msra.mxu0 0.0
    %586 = vmatprep.subr.mxu0 0.0
    %587 = vmatpush2.xpose.msra.mxu0 0.0
    %588 = vmatprep.subr.mxu0 0.0
    %589 = vmatpush2.xpose.msra.mxu0 0.0
    %590 = vmatprep.subr.mxu0 0.0
    %591 = vmatpush2.xpose.msra.mxu0 0.0
    %592 = vmatprep.subr.mxu0 0.0
    %593 = vmatpush2.xpose.msra.mxu0 0.0
    %594 = vmatprep.subr.mxu0 0.0
    %595 = vmatpush2.xpose.msra.mxu0 0.0
    %596 = vmatprep.subr.mxu0 0.0
    %597 = vmatpush2.xpose.msra.mxu0 0.0
    %598 = vmatprep.subr.mxu0 0.0
    %599 = vmatpush2.xpose.msra.mxu0 0.0
    %600 = vmatprep.subr.mxu0 0.0
    %601 = vmatpush2.xpose.msra.mxu0 0.0
    %602 = vmatprep.subr.mxu0 0.0
    %603 = vmatpush2.xpose.msra.mxu0 0.0
    %604 = vmatprep.subr.mxu0 0.0
    %605 = vmatpush2.xpose.msra.mxu0 0.0
    %606 = vmatprep.subr.mxu0 0.0
    %607 = vmatpush2.xpose.msra.mxu0 0.0
    %608 = vmatprep.mubr.f32.mxu0 0.0
    %609 = vmatmul.mubr.f32.gmra.mxu0 %v540
    %v610 = vpop.f32.mrf.mxu0
    %v611 = vadd.f32 0.0, %v610
    %v612 = vpop.f32.mrf.mxu0
    %613 = vdwg.mxu0
    %615 = vrot.lane.b32.xlu0 %v212, 64
    %v616 = vpop.permute.xlu0 %615
    %v617 = vsel %vm231, %v212, 0
    %v619 = vsel %vm231, %v616, 0
    %621 = vmatprep.subr.mxu0 0.0
    %622 = vmatpush1.xpose.msra.mxu0 0.0
    %623 = vmatprep.subr.mxu0 0.0
    %624 = vmatpush1.xpose.msra.mxu0 0.0
    %625 = vmatprep.subr.mxu0 0.0
    %626 = vmatpush1.xpose.msra.mxu0 0.0
    %627 = vmatprep.subr.mxu0 0.0
    %628 = vmatpush1.xpose.msra.mxu0 0.0
    %629 = vmatprep.subr.mxu0 0.0
    %630 = vmatpush1.xpose.msra.mxu0 0.0
    %631 = vmatprep.subr.mxu0 0.0
    %632 = vmatpush1.xpose.msra.mxu0 0.0
    %633 = vmatprep.subr.mxu0 0.0
    %634 = vmatpush1.xpose.msra.mxu0 0.0
    %635 = vmatprep.subr.mxu0 0.0
    %636 = vmatpush1.xpose.msra.mxu0 0.0
    %637 = vmatprep.subr.mxu0 0.0
    %638 = vmatpush1.xpose.msra.mxu0 0.0
    %639 = vmatprep.subr.mxu0 0.0
    %640 = vmatpush1.xpose.msra.mxu0 0.0
    %641 = vmatprep.subr.mxu0 0.0
    %642 = vmatpush1.xpose.msra.mxu0 0.0
    %643 = vmatprep.subr.mxu0 0.0
    %644 = vmatpush1.xpose.msra.mxu0 0.0
    %645 = vmatprep.subr.mxu0 0.0
    %646 = vmatpush1.xpose.msra.mxu0 0.0
    %647 = vmatprep.subr.mxu0 0.0
    %648 = vmatpush1.xpose.msra.mxu0 0.0
    %649 = vmatprep.subr.mxu0 0.0
    %650 = vmatpush1.xpose.msra.mxu0 0.0
    %651 = vmatprep.subr.mxu0 0.0
    %652 = vmatpush1.xpose.msra.mxu0 %v619
    %653 = vmatprep.subr.mxu0 0.0
    %654 = vmatpush2.xpose.msra.mxu0 0.0
    %655 = vmatprep.subr.mxu0 0.0
    %656 = vmatpush2.xpose.msra.mxu0 0.0
    %657 = vmatprep.subr.mxu0 0.0
    %658 = vmatpush2.xpose.msra.mxu0 0.0
    %659 = vmatprep.subr.mxu0 0.0
    %660 = vmatpush2.xpose.msra.mxu0 0.0
    %661 = vmatprep.subr.mxu0 0.0
    %662 = vmatpush2.xpose.msra.mxu0 0.0
    %663 = vmatprep.subr.mxu0 0.0
    %664 = vmatpush2.xpose.msra.mxu0 0.0
    %665 = vmatprep.subr.mxu0 0.0
    %666 = vmatpush2.xpose.msra.mxu0 0.0
    %667 = vmatprep.subr.mxu0 0.0
    %668 = vmatpush2.xpose.msra.mxu0 0.0
    %669 = vmatprep.subr.mxu0 0.0
    %670 = vmatpush2.xpose.msra.mxu0 0.0
    %671 = vmatprep.subr.mxu0 0.0
    %672 = vmatpush2.xpose.msra.mxu0 0.0
    %673 = vmatprep.subr.mxu0 0.0
    %674 = vmatpush2.xpose.msra.mxu0 0.0
    %675 = vmatprep.subr.mxu0 0.0
    %676 = vmatpush2.xpose.msra.mxu0 0.0
    %677 = vmatprep.subr.mxu0 0.0
    %678 = vmatpush2.xpose.msra.mxu0 0.0
    %679 = vmatprep.subr.mxu0 0.0
    %680 = vmatpush2.xpose.msra.mxu0 0.0
    %681 = vmatprep.subr.mxu0 0.0
    %682 = vmatpush2.xpose.msra.mxu0 0.0
    %683 = vmatprep.subr.mxu0 0.0
    %684 = vmatpush2.xpose.msra.mxu0 0.0
    %685 = vmatprep.mubr.f32.mxu0 0.0
    %686 = vmatmul.mubr.f32.gmra.mxu0 %v617
    %v687 = vpop.f32.mrf.mxu0
    %v688 = vadd.f32 0.0, %v687
    %v689 = vpop.f32.mrf.mxu0
    %690 = vdwg.mxu0
    %692 = vrot.lane.b32.xlu0 %v218, 64
    %v693 = vpop.permute.xlu0 %692
    %v694 = vsel %vm231, %v218, 0
    %v696 = vsel %vm231, %v693, 0
    %698 = vmatprep.subr.mxu0 0.0
    %699 = vmatpush1.xpose.msra.mxu0 0.0
    %700 = vmatprep.subr.mxu0 0.0
    %701 = vmatpush1.xpose.msra.mxu0 0.0
    %702 = vmatprep.subr.mxu0 0.0
    %703 = vmatpush1.xpose.msra.mxu0 0.0
    %704 = vmatprep.subr.mxu0 0.0
    %705 = vmatpush1.xpose.msra.mxu0 0.0
    %706 = vmatprep.subr.mxu0 0.0
    %707 = vmatpush1.xpose.msra.mxu0 0.0
    %708 = vmatprep.subr.mxu0 0.0
    %709 = vmatpush1.xpose.msra.mxu0 0.0
    %710 = vmatprep.subr.mxu0 0.0
    %711 = vmatpush1.xpose.msra.mxu0 0.0
    %712 = vmatprep.subr.mxu0 0.0
    %713 = vmatpush1.xpose.msra.mxu0 0.0
    %714 = vmatprep.subr.mxu0 0.0
    %715 = vmatpush1.xpose.msra.mxu0 0.0
    %716 = vmatprep.subr.mxu0 0.0
    %717 = vmatpush1.xpose.msra.mxu0 0.0
    %718 = vmatprep.subr.mxu0 0.0
    %719 = vmatpush1.xpose.msra.mxu0 0.0
    %720 = vmatprep.subr.mxu0 0.0
    %721 = vmatpush1.xpose.msra.mxu0 0.0
    %722 = vmatprep.subr.mxu0 0.0
    %723 = vmatpush1.xpose.msra.mxu0 0.0
    %724 = vmatprep.subr.mxu0 0.0
    %725 = vmatpush1.xpose.msra.mxu0 0.0
    %726 = vmatprep.subr.mxu0 0.0
    %727 = vmatpush1.xpose.msra.mxu0 0.0
    %728 = vmatprep.subr.mxu0 0.0
    %729 = vmatpush1.xpose.msra.mxu0 %v696
    %730 = vmatprep.subr.mxu0 0.0
    %731 = vmatpush2.xpose.msra.mxu0 0.0
    %732 = vmatprep.subr.mxu0 0.0
    %733 = vmatpush2.xpose.msra.mxu0 0.0
    %734 = vmatprep.subr.mxu0 0.0
    %735 = vmatpush2.xpose.msra.mxu0 0.0
    %736 = vmatprep.subr.mxu0 0.0
    %737 = vmatpush2.xpose.msra.mxu0 0.0
    %738 = vmatprep.subr.mxu0 0.0
    %739 = vmatpush2.xpose.msra.mxu0 0.0
    %740 = vmatprep.subr.mxu0 0.0
    %741 = vmatpush2.xpose.msra.mxu0 0.0
    %742 = vmatprep.subr.mxu0 0.0
    %743 = vmatpush2.xpose.msra.mxu0 0.0
    %744 = vmatprep.subr.mxu0 0.0
    %745 = vmatpush2.xpose.msra.mxu0 0.0
    %746 = vmatprep.subr.mxu0 0.0
    %747 = vmatpush2.xpose.msra.mxu0 0.0
    %748 = vmatprep.subr.mxu0 0.0
    %749 = vmatpush2.xpose.msra.mxu0 0.0
    %750 = vmatprep.subr.mxu0 0.0
    %751 = vmatpush2.xpose.msra.mxu0 0.0
    %752 = vmatprep.subr.mxu0 0.0
    %753 = vmatpush2.xpose.msra.mxu0 0.0
    %754 = vmatprep.subr.mxu0 0.0
    %755 = vmatpush2.xpose.msra.mxu0 0.0
    %756 = vmatprep.subr.mxu0 0.0
    %757 = vmatpush2.xpose.msra.mxu0 0.0
    %758 = vmatprep.subr.mxu0 0.0
    %759 = vmatpush2.xpose.msra.mxu0 0.0
    %760 = vmatprep.subr.mxu0 0.0
    %761 = vmatpush2.xpose.msra.mxu0 0.0
    %762 = vmatprep.mubr.f32.mxu0 0.0
    %763 = vmatmul.mubr.f32.gmra.mxu0 %v694
    %v764 = vpop.f32.mrf.mxu0
    %v765 = vadd.f32 0.0, %v764
    %v766 = vpop.f32.mrf.mxu0
    %767 = vdwg.mxu0
    %769 = vrot.lane.b32.xlu0 %v224, 64
    %v770 = vpop.permute.xlu0 %769
    %v771 = vsel %vm231, %v224, 0
    %v773 = vsel %vm231, %v770, 0
    %775 = vmatprep.subr.mxu0 0.0
    %776 = vmatpush1.xpose.msra.mxu0 0.0
    %777 = vmatprep.subr.mxu0 0.0
    %778 = vmatpush1.xpose.msra.mxu0 0.0
    %779 = vmatprep.subr.mxu0 0.0
    %780 = vmatpush1.xpose.msra.mxu0 0.0
    %781 = vmatprep.subr.mxu0 0.0
    %782 = vmatpush1.xpose.msra.mxu0 0.0
    %783 = vmatprep.subr.mxu0 0.0
    %784 = vmatpush1.xpose.msra.mxu0 0.0
    %785 = vmatprep.subr.mxu0 0.0
    %786 = vmatpush1.xpose.msra.mxu0 0.0
    %787 = vmatprep.subr.mxu0 0.0
    %788 = vmatpush1.xpose.msra.mxu0 0.0
    %789 = vmatprep.subr.mxu0 0.0
    %790 = vmatpush1.xpose.msra.mxu0 0.0
    %791 = vmatprep.subr.mxu0 0.0
    %792 = vmatpush1.xpose.msra.mxu0 0.0
    %793 = vmatprep.subr.mxu0 0.0
    %794 = vmatpush1.xpose.msra.mxu0 0.0
    %795 = vmatprep.subr.mxu0 0.0
    %796 = vmatpush1.xpose.msra.mxu0 0.0
    %797 = vmatprep.subr.mxu0 0.0
    %798 = vmatpush1.xpose.msra.mxu0 0.0
    %799 = vmatprep.subr.mxu0 0.0
    %800 = vmatpush1.xpose.msra.mxu0 0.0
    %801 = vmatprep.subr.mxu0 0.0
    %802 = vmatpush1.xpose.msra.mxu0 0.0
    %803 = vmatprep.subr.mxu0 0.0
    %804 = vmatpush1.xpose.msra.mxu0 0.0
    %805 = vmatprep.subr.mxu0 0.0
    %806 = vmatpush1.xpose.msra.mxu0 %v773
    %807 = vmatprep.subr.mxu0 0.0
    %808 = vmatpush2.xpose.msra.mxu0 0.0
    %809 = vmatprep.subr.mxu0 0.0
    %810 = vmatpush2.xpose.msra.mxu0 0.0
    %811 = vmatprep.subr.mxu0 0.0
    %812 = vmatpush2.xpose.msra.mxu0 0.0
    %813 = vmatprep.subr.mxu0 0.0
    %814 = vmatpush2.xpose.msra.mxu0 0.0
    %815 = vmatprep.subr.mxu0 0.0
    %816 = vmatpush2.xpose.msra.mxu0 0.0
    %817 = vmatprep.subr.mxu0 0.0
    %818 = vmatpush2.xpose.msra.mxu0 0.0
    %819 = vmatprep.subr.mxu0 0.0
    %820 = vmatpush2.xpose.msra.mxu0 0.0
    %821 = vmatprep.subr.mxu0 0.0
    %822 = vmatpush2.xpose.msra.mxu0 0.0
    %823 = vmatprep.subr.mxu0 0.0
    %824 = vmatpush2.xpose.msra.mxu0 0.0
    %825 = vmatprep.subr.mxu0 0.0
    %826 = vmatpush2.xpose.msra.mxu0 0.0
    %827 = vmatprep.subr.mxu0 0.0
    %828 = vmatpush2.xpose.msra.mxu0 0.0
    %829 = vmatprep.subr.mxu0 0.0
    %830 = vmatpush2.xpose.msra.mxu0 0.0
    %831 = vmatprep.subr.mxu0 0.0
    %832 = vmatpush2.xpose.msra.mxu0 0.0
    %833 = vmatprep.subr.mxu0 0.0
    %834 = vmatpush2.xpose.msra.mxu0 0.0
    %835 = vmatprep.subr.mxu0 0.0
    %836 = vmatpush2.xpose.msra.mxu0 0.0
    %837 = vmatprep.subr.mxu0 0.0
    %838 = vmatpush2.xpose.msra.mxu0 0.0
    %839 = vmatprep.mubr.f32.mxu0 0.0
    %840 = vmatmul.mubr.f32.gmra.mxu0 %v771
    %v841 = vpop.f32.mrf.mxu0
    %v842 = vadd.f32 0.0, %v841
    %v843 = vpop.f32.mrf.mxu0
    %844 = vdwg.mxu0
    %v845 = vmul.f32 %v303, 0.125
    %v846 = vmul.f32 %v380, 0.125
    %v847 = vmul.f32 %v457, 0.125
    %v848 = vmul.f32 %v534, 0.125
    %v849 = vmul.f32 %v611, 0.125
    %v850 = vmul.f32 %v688, 0.125
    %v851 = vmul.f32 %v765, 0.125
    %v852 = vmul.f32 %v842, 0.125
    %vm853 = vcmask 64512
    %v854 = vsel %vm853, %v845, -inf
    %855 = vmax.xlane.f32.xlu0 %v854
    %v856 = vpop.xlane.xlu0 %855
    %v857 = vsel %vm853, %v846, -inf
    %858 = vmax.xlane.f32.xlu0 %v857
    %v859 = vpop.xlane.xlu0 %858
    %v860 = vsel %vm853, %v847, -inf
    %861 = vmax.xlane.f32.xlu0 %v860
    %v862 = vpop.xlane.xlu0 %861
    %v863 = vsel %vm853, %v848, -inf
    %864 = vmax.xlane.f32.xlu0 %v863
    %v865 = vpop.xlane.xlu0 %864
    %v866 = vsel %vm853, %v849, -inf
    %867 = vmax.xlane.f32.xlu0 %v866
    %v868 = vpop.xlane.xlu0 %867
    %v869 = vsel %vm853, %v850, -inf
    %870 = vmax.xlane.f32.xlu0 %v869
    %v871 = vpop.xlane.xlu0 %870
    %v872 = vsel %vm853, %v851, -inf
    %873 = vmax.xlane.f32.xlu0 %v872
    %v874 = vpop.xlane.xlu0 %873
    %v875 = vsel %vm853, %v852, -inf
    %876 = vmax.xlane.f32.xlu0 %v875
    %v877 = vpop.xlane.xlu0 %876
    %v878 = vsub.f32 %v845, %v856
    %v879 = vsub.f32 %v846, %v859
    %v880 = vsub.f32 %v847, %v862
    %v881 = vsub.f32 %v848, %v865
    %v882 = vsub.f32 %v849, %v868
    %v883 = vsub.f32 %v850, %v871
    %v884 = vsub.f32 %v851, %v874
    %v885 = vsub.f32 %v852, %v877
    %v886 = vmul.f32 %v878, 1.442695
    %v887 = vpow.pop %v886
    %v888 = vmul.f32 %v879, 1.442695
    %v889 = vpow.pop %v888
    %v890 = vmul.f32 %v880, 1.442695
    %v891 = vpow.pop %v890
    %v892 = vmul.f32 %v881, 1.442695
    %v893 = vpow.pop %v892
    %v894 = vmul.f32 %v882, 1.442695
    %v895 = vpow.pop %v894
    %v896 = vmul.f32 %v883, 1.442695
    %v897 = vpow.pop %v896
    %v898 = vmul.f32 %v884, 1.442695
    %v899 = vpow.pop %v898
    %v900 = vmul.f32 %v885, 1.442695
    %v901 = vpow.pop %v900
    %v902 = vsel %vm853, %v887, 0.0
    %903 = vadd.xlane.f32.xlu0 %v902
    %v904 = vpop.xlane.xlu0 %903
    %v905 = vsel %vm853, %v889, 0.0
    %906 = vadd.xlane.f32.xlu0 %v905
    %v907 = vpop.xlane.xlu0 %906
    %v908 = vsel %vm853, %v891, 0.0
    %909 = vadd.xlane.f32.xlu0 %v908
    %v910 = vpop.xlane.xlu0 %909
    %v911 = vsel %vm853, %v893, 0.0
    %912 = vadd.xlane.f32.xlu0 %v911
    %v913 = vpop.xlane.xlu0 %912
    %v914 = vsel %vm853, %v895, 0.0
    %915 = vadd.xlane.f32.xlu0 %v914
    %v916 = vpop.xlane.xlu0 %915
    %v917 = vsel %vm853, %v897, 0.0
    %918 = vadd.xlane.f32.xlu0 %v917
    %v919 = vpop.xlane.xlu0 %918
    %v920 = vsel %vm853, %v899, 0.0
    %921 = vadd.xlane.f32.xlu0 %v920
    %v922 = vpop.xlane.xlu0 %921
    %v923 = vsel %vm853, %v901, 0.0
    %924 = vadd.xlane.f32.xlu0 %v923
    %v925 = vpop.xlane.xlu0 %924
    %v926 = vrcp.pop %v904
    %v927 = vrcp.pop %v907
    %v928 = vrcp.pop %v910
    %v929 = vrcp.pop %v913
    %v930 = vrcp.pop %v916
    %v931 = vrcp.pop %v919
    %v932 = vrcp.pop %v922
    %v933 = vrcp.pop %v925
    %v934 = vmul.f32 %v887, %v926
    %v935 = vmul.f32 %v889, %v927
    %v936 = vmul.f32 %v891, %v928
    %v937 = vmul.f32 %v893, %v929
    %v938 = vmul.f32 %v895, %v930
    %v939 = vmul.f32 %v897, %v931
    %v940 = vmul.f32 %v899, %v932
    %v941 = vmul.f32 %v901, %v933
    %v943 = vsel %vm853, %v934, 0
    %945 = vmatprep.subr.mxu0 0.0
    %946 = vmatpush1.msra.mxu0 0.0
    %947 = vmatprep.subr.mxu0 0.0
    %948 = vmatpush1.msra.mxu0 0.0
    %949 = vmatprep.subr.mxu0 0.0
    %950 = vmatpush1.msra.mxu0 0.0
    %951 = vmatprep.subr.mxu0 0.0
    %952 = vmatpush1.msra.mxu0 0.0
    %953 = vmatprep.subr.mxu0 0.0
    %954 = vmatpush1.msra.mxu0 0.0
    %955 = vmatprep.subr.mxu0 0.0
    %956 = vmatpush1.msra.mxu0 0.0
    %957 = vmatprep.subr.mxu0 0.0
    %958 = vmatpush1.msra.mxu0 0.0
    %959 = vmatprep.subr.mxu0 0.0
    %960 = vmatpush1.msra.mxu0 0.0
    %961 = vmatprep.subr.mxu0 0.0
    %962 = vmatpush1.msra.mxu0 0.0
    %963 = vmatprep.subr.mxu0 0.0
    %964 = vmatpush1.msra.mxu0 0.0
    %965 = vmatprep.subr.mxu0 0.0
    %966 = vmatpush1.msra.mxu0 0.0
    %967 = vmatprep.subr.mxu0 0.0
    %968 = vmatpush1.msra.mxu0 0.0
    %969 = vmatprep.subr.mxu0 0.0
    %970 = vmatpush1.msra.mxu0 0.0
    %971 = vmatprep.subr.mxu0 0.0
    %972 = vmatpush1.msra.mxu0 0.0
    %973 = vmatprep.subr.mxu0 0.0
    %974 = vmatpush1.msra.mxu0 0.0
    %975 = vmatprep.subr.mxu0 0.0
    %976 = vmatpush1.msra.mxu0 %v184
    %977 = vmatprep.subr.mxu0 0.0
    %978 = vmatpush2.msra.mxu0 0.0
    %979 = vmatprep.subr.mxu0 0.0
    %980 = vmatpush2.msra.mxu0 0.0
    %981 = vmatprep.subr.mxu0 0.0
    %982 = vmatpush2.msra.mxu0 0.0
    %983 = vmatprep.subr.mxu0 0.0
    %984 = vmatpush2.msra.mxu0 0.0
    %985 = vmatprep.subr.mxu0 0.0
    %986 = vmatpush2.msra.mxu0 0.0
    %987 = vmatprep.subr.mxu0 0.0
    %988 = vmatpush2.msra.mxu0 0.0
    %989 = vmatprep.subr.mxu0 0.0
    %990 = vmatpush2.msra.mxu0 0.0
    %991 = vmatprep.subr.mxu0 0.0
    %992 = vmatpush2.msra.mxu0 0.0
    %993 = vmatprep.subr.mxu0 0.0
    %994 = vmatpush2.msra.mxu0 0.0
    %995 = vmatprep.subr.mxu0 0.0
    %996 = vmatpush2.msra.mxu0 0.0
    %997 = vmatprep.subr.mxu0 0.0
    %998 = vmatpush2.msra.mxu0 0.0
    %999 = vmatprep.subr.mxu0 0.0
    %1000 = vmatpush2.msra.mxu0 0.0
    %1001 = vmatprep.subr.mxu0 0.0
    %1002 = vmatpush2.msra.mxu0 0.0
    %1003 = vmatprep.subr.mxu0 0.0
    %1004 = vmatpush2.msra.mxu0 0.0
    %1005 = vmatprep.subr.mxu0 0.0
    %1006 = vmatpush2.msra.mxu0 0.0
    %1007 = vmatprep.subr.mxu0 0.0
    %1008 = vmatpush2.msra.mxu0 0.0
    %1009 = vmatprep.mubr.f32.mxu0 0.0
    %1010 = vmatmul.mubr.f32.gmra.mxu0 %v943
    %v1011 = vpop.f32.mrf.mxu0
    %v1012 = vadd.f32 0.0, %v1011
    %v1013 = vpop.f32.mrf.mxu0
    %1014 = vdwg.mxu0
    %v1016 = vsel %vm853, %v935, 0
    %1018 = vmatprep.subr.mxu0 0.0
    %1019 = vmatpush1.msra.mxu0 0.0
    %1020 = vmatprep.subr.mxu0 0.0
    %1021 = vmatpush1.msra.mxu0 0.0
    %1022 = vmatprep.subr.mxu0 0.0
    %1023 = vmatpush1.msra.mxu0 0.0
    %1024 = vmatprep.subr.mxu0 0.0
    %1025 = vmatpush1.msra.mxu0 0.0
    %1026 = vmatprep.subr.mxu0 0.0
    %1027 = vmatpush1.msra.mxu0 0.0
    %1028 = vmatprep.subr.mxu0 0.0
    %1029 = vmatpush1.msra.mxu0 0.0
    %1030 = vmatprep.subr.mxu0 0.0
    %1031 = vmatpush1.msra.mxu0 0.0
    %1032 = vmatprep.subr.mxu0 0.0
    %1033 = vmatpush1.msra.mxu0 0.0
    %1034 = vmatprep.subr.mxu0 0.0
    %1035 = vmatpush1.msra.mxu0 0.0
    %1036 = vmatprep.subr.mxu0 0.0
    %1037 = vmatpush1.msra.mxu0 0.0
    %1038 = vmatprep.subr.mxu0 0.0
    %1039 = vmatpush1.msra.mxu0 0.0
    %1040 = vmatprep.subr.mxu0 0.0
    %1041 = vmatpush1.msra.mxu0 0.0
    %1042 = vmatprep.subr.mxu0 0.0
    %1043 = vmatpush1.msra.mxu0 0.0
    %1044 = vmatprep.subr.mxu0 0.0
    %1045 = vmatpush1.msra.mxu0 0.0
    %1046 = vmatprep.subr.mxu0 0.0
    %1047 = vmatpush1.msra.mxu0 0.0
    %1048 = vmatprep.subr.mxu0 0.0
    %1049 = vmatpush1.msra.mxu0 %v190
    %1050 = vmatprep.subr.mxu0 0.0
    %1051 = vmatpush2.msra.mxu0 0.0
    %1052 = vmatprep.subr.mxu0 0.0
    %1053 = vmatpush2.msra.mxu0 0.0
    %1054 = vmatprep.subr.mxu0 0.0
    %1055 = vmatpush2.msra.mxu0 0.0
    %1056 = vmatprep.subr.mxu0 0.0
    %1057 = vmatpush2.msra.mxu0 0.0
    %1058 = vmatprep.subr.mxu0 0.0
    %1059 = vmatpush2.msra.mxu0 0.0
    %1060 = vmatprep.subr.mxu0 0.0
    %1061 = vmatpush2.msra.mxu0 0.0
    %1062 = vmatprep.subr.mxu0 0.0
    %1063 = vmatpush2.msra.mxu0 0.0
    %1064 = vmatprep.subr.mxu0 0.0
    %1065 = vmatpush2.msra.mxu0 0.0
    %1066 = vmatprep.subr.mxu0 0.0
    %1067 = vmatpush2.msra.mxu0 0.0
    %1068 = vmatprep.subr.mxu0 0.0
    %1069 = vmatpush2.msra.mxu0 0.0
    %1070 = vmatprep.subr.mxu0 0.0
    %1071 = vmatpush2.msra.mxu0 0.0
    %1072 = vmatprep.subr.mxu0 0.0
    %1073 = vmatpush2.msra.mxu0 0.0
    %1074 = vmatprep.subr.mxu0 0.0
    %1075 = vmatpush2.msra.mxu0 0.0
    %1076 = vmatprep.subr.mxu0 0.0
    %1077 = vmatpush2.msra.mxu0 0.0
    %1078 = vmatprep.subr.mxu0 0.0
    %1079 = vmatpush2.msra.mxu0 0.0
    %1080 = vmatprep.subr.mxu0 0.0
    %1081 = vmatpush2.msra.mxu0 0.0
    %1082 = vmatprep.mubr.f32.mxu0 0.0
    %1083 = vmatmul.mubr.f32.gmra.mxu0 %v1016
    %v1084 = vpop.f32.mrf.mxu0
    %v1085 = vadd.f32 0.0, %v1084
    %v1086 = vpop.f32.mrf.mxu0
    %1087 = vdwg.mxu0
    %v1089 = vsel %vm853, %v936, 0
    %1091 = vmatprep.subr.mxu0 0.0
    %1092 = vmatpush1.msra.mxu0 0.0
    %1093 = vmatprep.subr.mxu0 0.0
    %1094 = vmatpush1.msra.mxu0 0.0
    %1095 = vmatprep.subr.mxu0 0.0
    %1096 = vmatpush1.msra.mxu0 0.0
    %1097 = vmatprep.subr.mxu0 0.0
    %1098 = vmatpush1.msra.mxu0 0.0
    %1099 = vmatprep.subr.mxu0 0.0
    %1100 = vmatpush1.msra.mxu0 0.0
    %1101 = vmatprep.subr.mxu0 0.0
    %1102 = vmatpush1.msra.mxu0 0.0
    %1103 = vmatprep.subr.mxu0 0.0
    %1104 = vmatpush1.msra.mxu0 0.0
    %1105 = vmatprep.subr.mxu0 0.0
    %1106 = vmatpush1.msra.mxu0 0.0
    %1107 = vmatprep.subr.mxu0 0.0
    %1108 = vmatpush1.msra.mxu0 0.0
    %1109 = vmatprep.subr.mxu0 0.0
    %1110 = vmatpush1.msra.mxu0 0.0
    %1111 = vmatprep.subr.mxu0 0.0
    %1112 = vmatpush1.msra.mxu0 0.0
    %1113 = vmatprep.subr.mxu0 0.0
    %1114 = vmatpush1.msra.mxu0 0.0
    %1115 = vmatprep.subr.mxu0 0.0
    %1116 = vmatpush1.msra.mxu0 0.0
    %1117 = vmatprep.subr.mxu0 0.0
    %1118 = vmatpush1.msra.mxu0 0.0
    %1119 = vmatprep.subr.mxu0 0.0
    %1120 = vmatpush1.msra.mxu0 0.0
    %1121 = vmatprep.subr.mxu0 0.0
    %1122 = vmatpush1.msra.mxu0 %v196
    %1123 = vmatprep.subr.mxu0 0.0
    %1124 = vmatpush2.msra.mxu0 0.0
    %1125 = vmatprep.subr.mxu0 0.0
    %1126 = vmatpush2.msra.mxu0 0.0
    %1127 = vmatprep.subr.mxu0 0.0
    %1128 = vmatpush2.msra.mxu0 0.0
    %1129 = vmatprep.subr.mxu0 0.0
    %1130 = vmatpush2.msra.mxu0 0.0
    %1131 = vmatprep.subr.mxu0 0.0
    %1132 = vmatpush2.msra.mxu0 0.0
    %1133 = vmatprep.subr.mxu0 0.0
    %1134 = vmatpush2.msra.mxu0 0.0
    %1135 = vmatprep.subr.mxu0 0.0
    %1136 = vmatpush2.msra.mxu0 0.0
    %1137 = vmatprep.subr.mxu0 0.0
    %1138 = vmatpush2.msra.mxu0 0.0
    %1139 = vmatprep.subr.mxu0 0.0
    %1140 = vmatpush2.msra.mxu0 0.0
    %1141 = vmatprep.subr.mxu0 0.0
    %1142 = vmatpush2.msra.mxu0 0.0
    %1143 = vmatprep.subr.mxu0 0.0
    %1144 = vmatpush2.msra.mxu0 0.0
    %1145 = vmatprep.subr.mxu0 0.0
    %1146 = vmatpush2.msra.mxu0 0.0
    %1147 = vmatprep.subr.mxu0 0.0
    %1148 = vmatpush2.msra.mxu0 0.0
    %1149 = vmatprep.subr.mxu0 0.0
    %1150 = vmatpush2.msra.mxu0 0.0
    %1151 = vmatprep.subr.mxu0 0.0
    %1152 = vmatpush2.msra.mxu0 0.0
    %1153 = vmatprep.subr.mxu0 0.0
    %1154 = vmatpush2.msra.mxu0 0.0
    %1155 = vmatprep.mubr.f32.mxu0 0.0
    %1156 = vmatmul.mubr.f32.gmra.mxu0 %v1089
    %v1157 = vpop.f32.mrf.mxu0
    %v1158 = vadd.f32 0.0, %v1157
    %v1159 = vpop.f32.mrf.mxu0
    %1160 = vdwg.mxu0
    %v1162 = vsel %vm853, %v937, 0
    %1164 = vmatprep.subr.mxu0 0.0
    %1165 = vmatpush1.msra.mxu0 0.0
    %1166 = vmatprep.subr.mxu0 0.0
    %1167 = vmatpush1.msra.mxu0 0.0
    %1168 = vmatprep.subr.mxu0 0.0
    %1169 = vmatpush1.msra.mxu0 0.0
    %1170 = vmatprep.subr.mxu0 0.0
    %1171 = vmatpush1.msra.mxu0 0.0
    %1172 = vmatprep.subr.mxu0 0.0
    %1173 = vmatpush1.msra.mxu0 0.0
    %1174 = vmatprep.subr.mxu0 0.0
    %1175 = vmatpush1.msra.mxu0 0.0
    %1176 = vmatprep.subr.mxu0 0.0
    %1177 = vmatpush1.msra.mxu0 0.0
    %1178 = vmatprep.subr.mxu0 0.0
    %1179 = vmatpush1.msra.mxu0 0.0
    %1180 = vmatprep.subr.mxu0 0.0
    %1181 = vmatpush1.msra.mxu0 0.0
    %1182 = vmatprep.subr.mxu0 0.0
    %1183 = vmatpush1.msra.mxu0 0.0
    %1184 = vmatprep.subr.mxu0 0.0
    %1185 = vmatpush1.msra.mxu0 0.0
    %1186 = vmatprep.subr.mxu0 0.0
    %1187 = vmatpush1.msra.mxu0 0.0
    %1188 = vmatprep.subr.mxu0 0.0
    %1189 = vmatpush1.msra.mxu0 0.0
    %1190 = vmatprep.subr.mxu0 0.0
    %1191 = vmatpush1.msra.mxu0 0.0
    %1192 = vmatprep.subr.mxu0 0.0
    %1193 = vmatpush1.msra.mxu0 0.0
    %1194 = vmatprep.subr.mxu0 0.0
    %1195 = vmatpush1.msra.mxu0 %v202
    %1196 = vmatprep.subr.mxu0 0.0
    %1197 = vmatpush2.msra.mxu0 0.0
    %1198 = vmatprep.subr.mxu0 0.0
    %1199 = vmatpush2.msra.mxu0 0.0
    %1200 = vmatprep.subr.mxu0 0.0
    %1201 = vmatpush2.msra.mxu0 0.0
    %1202 = vmatprep.subr.mxu0 0.0
    %1203 = vmatpush2.msra.mxu0 0.0
    %1204 = vmatprep.subr.mxu0 0.0
    %1205 = vmatpush2.msra.mxu0 0.0
    %1206 = vmatprep.subr.mxu0 0.0
    %1207 = vmatpush2.msra.mxu0 0.0
    %1208 = vmatprep.subr.mxu0 0.0
    %1209 = vmatpush2.msra.mxu0 0.0
    %1210 = vmatprep.subr.mxu0 0.0
    %1211 = vmatpush2.msra.mxu0 0.0
    %1212 = vmatprep.subr.mxu0 0.0
    %1213 = vmatpush2.msra.mxu0 0.0
    %1214 = vmatprep.subr.mxu0 0.0
    %1215 = vmatpush2.msra.mxu0 0.0
    %1216 = vmatprep.subr.mxu0 0.0
    %1217 = vmatpush2.msra.mxu0 0.0
    %1218 = vmatprep.subr.mxu0 0.0
    %1219 = vmatpush2.msra.mxu0 0.0
    %1220 = vmatprep.subr.mxu0 0.0
    %1221 = vmatpush2.msra.mxu0 0.0
    %1222 = vmatprep.subr.mxu0 0.0
    %1223 = vmatpush2.msra.mxu0 0.0
    %1224 = vmatprep.subr.mxu0 0.0
    %1225 = vmatpush2.msra.mxu0 0.0
    %1226 = vmatprep.subr.mxu0 0.0
    %1227 = vmatpush2.msra.mxu0 0.0
    %1228 = vmatprep.mubr.f32.mxu0 0.0
    %1229 = vmatmul.mubr.f32.gmra.mxu0 %v1162
    %v1230 = vpop.f32.mrf.mxu0
    %v1231 = vadd.f32 0.0, %v1230
    %v1232 = vpop.f32.mrf.mxu0
    %1233 = vdwg.mxu0
    %v1235 = vsel %vm853, %v938, 0
    %1237 = vmatprep.subr.mxu0 0.0
    %1238 = vmatpush1.msra.mxu0 0.0
    %1239 = vmatprep.subr.mxu0 0.0
    %1240 = vmatpush1.msra.mxu0 0.0
    %1241 = vmatprep.subr.mxu0 0.0
    %1242 = vmatpush1.msra.mxu0 0.0
    %1243 = vmatprep.subr.mxu0 0.0
    %1244 = vmatpush1.msra.mxu0 0.0
    %1245 = vmatprep.subr.mxu0 0.0
    %1246 = vmatpush1.msra.mxu0 0.0
    %1247 = vmatprep.subr.mxu0 0.0
    %1248 = vmatpush1.msra.mxu0 0.0
    %1249 = vmatprep.subr.mxu0 0.0
    %1250 = vmatpush1.msra.mxu0 0.0
    %1251 = vmatprep.subr.mxu0 0.0
    %1252 = vmatpush1.msra.mxu0 0.0
    %1253 = vmatprep.subr.mxu0 0.0
    %1254 = vmatpush1.msra.mxu0 0.0
    %1255 = vmatprep.subr.mxu0 0.0
    %1256 = vmatpush1.msra.mxu0 0.0
    %1257 = vmatprep.subr.mxu0 0.0
    %1258 = vmatpush1.msra.mxu0 0.0
    %1259 = vmatprep.subr.mxu0 0.0
    %1260 = vmatpush1.msra.mxu0 0.0
    %1261 = vmatprep.subr.mxu0 0.0
    %1262 = vmatpush1.msra.mxu0 0.0
    %1263 = vmatprep.subr.mxu0 0.0
    %1264 = vmatpush1.msra.mxu0 0.0
    %1265 = vmatprep.subr.mxu0 0.0
    %1266 = vmatpush1.msra.mxu0 0.0
    %1267 = vmatprep.subr.mxu0 0.0
    %1268 = vmatpush1.msra.mxu0 %v208
    %1269 = vmatprep.subr.mxu0 0.0
    %1270 = vmatpush2.msra.mxu0 0.0
    %1271 = vmatprep.subr.mxu0 0.0
    %1272 = vmatpush2.msra.mxu0 0.0
    %1273 = vmatprep.subr.mxu0 0.0
    %1274 = vmatpush2.msra.mxu0 0.0
    %1275 = vmatprep.subr.mxu0 0.0
    %1276 = vmatpush2.msra.mxu0 0.0
    %1277 = vmatprep.subr.mxu0 0.0
    %1278 = vmatpush2.msra.mxu0 0.0
    %1279 = vmatprep.subr.mxu0 0.0
    %1280 = vmatpush2.msra.mxu0 0.0
    %1281 = vmatprep.subr.mxu0 0.0
    %1282 = vmatpush2.msra.mxu0 0.0
    %1283 = vmatprep.subr.mxu0 0.0
    %1284 = vmatpush2.msra.mxu0 0.0
    %1285 = vmatprep.subr.mxu0 0.0
    %1286 = vmatpush2.msra.mxu0 0.0
    %1287 = vmatprep.subr.mxu0 0.0
    %1288 = vmatpush2.msra.mxu0 0.0
    %1289 = vmatprep.subr.mxu0 0.0
    %1290 = vmatpush2.msra.mxu0 0.0
    %1291 = vmatprep.subr.mxu0 0.0
    %1292 = vmatpush2.msra.mxu0 0.0
    %1293 = vmatprep.subr.mxu0 0.0
    %1294 = vmatpush2.msra.mxu0 0.0
    %1295 = vmatprep.subr.mxu0 0.0
    %1296 = vmatpush2.msra.mxu0 0.0
    %1297 = vmatprep.subr.mxu0 0.0
    %1298 = vmatpush2.msra.mxu0 0.0
    %1299 = vmatprep.subr.mxu0 0.0
    %1300 = vmatpush2.msra.mxu0 0.0
    %1301 = vmatprep.mubr.f32.mxu0 0.0
    %1302 = vmatmul.mubr.f32.gmra.mxu0 %v1235
    %v1303 = vpop.f32.mrf.mxu0
    %v1304 = vadd.f32 0.0, %v1303
    %v1305 = vpop.f32.mrf.mxu0
    %1306 = vdwg.mxu0
    %v1308 = vsel %vm853, %v939, 0
    %1310 = vmatprep.subr.mxu0 0.0
    %1311 = vmatpush1.msra.mxu0 0.0
    %1312 = vmatprep.subr.mxu0 0.0
    %1313 = vmatpush1.msra.mxu0 0.0
    %1314 = vmatprep.subr.mxu0 0.0
    %1315 = vmatpush1.msra.mxu0 0.0
    %1316 = vmatprep.subr.mxu0 0.0
    %1317 = vmatpush1.msra.mxu0 0.0
    %1318 = vmatprep.subr.mxu0 0.0
    %1319 = vmatpush1.msra.mxu0 0.0
    %1320 = vmatprep.subr.mxu0 0.0
    %1321 = vmatpush1.msra.mxu0 0.0
    %1322 = vmatprep.subr.mxu0 0.0
    %1323 = vmatpush1.msra.mxu0 0.0
    %1324 = vmatprep.subr.mxu0 0.0
    %1325 = vmatpush1.msra.mxu0 0.0
    %1326 = vmatprep.subr.mxu0 0.0
    %1327 = vmatpush1.msra.mxu0 0.0
    %1328 = vmatprep.subr.mxu0 0.0
    %1329 = vmatpush1.msra.mxu0 0.0
    %1330 = vmatprep.subr.mxu0 0.0
    %1331 = vmatpush1.msra.mxu0 0.0
    %1332 = vmatprep.subr.mxu0 0.0
    %1333 = vmatpush1.msra.mxu0 0.0
    %1334 = vmatprep.subr.mxu0 0.0
    %1335 = vmatpush1.msra.mxu0 0.0
    %1336 = vmatprep.subr.mxu0 0.0
    %1337 = vmatpush1.msra.mxu0 0.0
    %1338 = vmatprep.subr.mxu0 0.0
    %1339 = vmatpush1.msra.mxu0 0.0
    %1340 = vmatprep.subr.mxu0 0.0
    %1341 = vmatpush1.msra.mxu0 %v214
    %1342 = vmatprep.subr.mxu0 0.0
    %1343 = vmatpush2.msra.mxu0 0.0
    %1344 = vmatprep.subr.mxu0 0.0
    %1345 = vmatpush2.msra.mxu0 0.0
    %1346 = vmatprep.subr.mxu0 0.0
    %1347 = vmatpush2.msra.mxu0 0.0
    %1348 = vmatprep.subr.mxu0 0.0
    %1349 = vmatpush2.msra.mxu0 0.0
    %1350 = vmatprep.subr.mxu0 0.0
    %1351 = vmatpush2.msra.mxu0 0.0
    %1352 = vmatprep.subr.mxu0 0.0
    %1353 = vmatpush2.msra.mxu0 0.0
    %1354 = vmatprep.subr.mxu0 0.0
    %1355 = vmatpush2.msra.mxu0 0.0
    %1356 = vmatprep.subr.mxu0 0.0
    %1357 = vmatpush2.msra.mxu0 0.0
    %1358 = vmatprep.subr.mxu0 0.0
    %1359 = vmatpush2.msra.mxu0 0.0
    %1360 = vmatprep.subr.mxu0 0.0
    %1361 = vmatpush2.msra.mxu0 0.0
    %1362 = vmatprep.subr.mxu0 0.0
    %1363 = vmatpush2.msra.mxu0 0.0
    %1364 = vmatprep.subr.mxu0 0.0
    %1365 = vmatpush2.msra.mxu0 0.0
    %1366 = vmatprep.subr.mxu0 0.0
    %1367 = vmatpush2.msra.mxu0 0.0
    %1368 = vmatprep.subr.mxu0 0.0
    %1369 = vmatpush2.msra.mxu0 0.0
    %1370 = vmatprep.subr.mxu0 0.0
    %1371 = vmatpush2.msra.mxu0 0.0
    %1372 = vmatprep.subr.mxu0 0.0
    %1373 = vmatpush2.msra.mxu0 0.0
    %1374 = vmatprep.mubr.f32.mxu0 0.0
    %1375 = vmatmul.mubr.f32.gmra.mxu0 %v1308
    %v1376 = vpop.f32.mrf.mxu0
    %v1377 = vadd.f32 0.0, %v1376
    %v1378 = vpop.f32.mrf.mxu0
    %1379 = vdwg.mxu0
    %v1381 = vsel %vm853, %v940, 0
    %1383 = vmatprep.subr.mxu0 0.0
    %1384 = vmatpush1.msra.mxu0 0.0
    %1385 = vmatprep.subr.mxu0 0.0
    %1386 = vmatpush1.msra.mxu0 0.0
    %1387 = vmatprep.subr.mxu0 0.0
    %1388 = vmatpush1.msra.mxu0 0.0
    %1389 = vmatprep.subr.mxu0 0.0
    %1390 = vmatpush1.msra.mxu0 0.0
    %1391 = vmatprep.subr.mxu0 0.0
    %1392 = vmatpush1.msra.mxu0 0.0
    %1393 = vmatprep.subr.mxu0 0.0
    %1394 = vmatpush1.msra.mxu0 0.0
    %1395 = vmatprep.subr.mxu0 0.0
    %1396 = vmatpush1.msra.mxu0 0.0
    %1397 = vmatprep.subr.mxu0 0.0
    %1398 = vmatpush1.msra.mxu0 0.0
    %1399 = vmatprep.subr.mxu0 0.0
    %1400 = vmatpush1.msra.mxu0 0.0
    %1401 = vmatprep.subr.mxu0 0.0
    %1402 = vmatpush1.msra.mxu0 0.0
    %1403 = vmatprep.subr.mxu0 0.0
    %1404 = vmatpush1.msra.mxu0 0.0
    %1405 = vmatprep.subr.mxu0 0.0
    %1406 = vmatpush1.msra.mxu0 0.0
    %1407 = vmatprep.subr.mxu0 0.0
    %1408 = vmatpush1.msra.mxu0 0.0
    %1409 = vmatprep.subr.mxu0 0.0
    %1410 = vmatpush1.msra.mxu0 0.0
    %1411 = vmatprep.subr.mxu0 0.0
    %1412 = vmatpush1.msra.mxu0 0.0
    %1413 = vmatprep.subr.mxu0 0.0
    %1414 = vmatpush1.msra.mxu0 %v220
    %1415 = vmatprep.subr.mxu0 0.0
    %1416 = vmatpush2.msra.mxu0 0.0
    %1417 = vmatprep.subr.mxu0 0.0
    %1418 = vmatpush2.msra.mxu0 0.0
    %1419 = vmatprep.subr.mxu0 0.0
    %1420 = vmatpush2.msra.mxu0 0.0
    %1421 = vmatprep.subr.mxu0 0.0
    %1422 = vmatpush2.msra.mxu0 0.0
    %1423 = vmatprep.subr.mxu0 0.0
    %1424 = vmatpush2.msra.mxu0 0.0
    %1425 = vmatprep.subr.mxu0 0.0
    %1426 = vmatpush2.msra.mxu0 0.0
    %1427 = vmatprep.subr.mxu0 0.0
    %1428 = vmatpush2.msra.mxu0 0.0
    %1429 = vmatprep.subr.mxu0 0.0
    %1430 = vmatpush2.msra.mxu0 0.0
    %1431 = vmatprep.subr.mxu0 0.0
    %1432 = vmatpush2.msra.mxu0 0.0
    %1433 = vmatprep.subr.mxu0 0.0
    %1434 = vmatpush2.msra.mxu0 0.0
    %1435 = vmatprep.subr.mxu0 0.0
    %1436 = vmatpush2.msra.mxu0 0.0
    %1437 = vmatprep.subr.mxu0 0.0
    %1438 = vmatpush2.msra.mxu0 0.0
    %1439 = vmatprep.subr.mxu0 0.0
    %1440 = vmatpush2.msra.mxu0 0.0
    %1441 = vmatprep.subr.mxu0 0.0
    %1442 = vmatpush2.msra.mxu0 0.0
    %1443 = vmatprep.subr.mxu0 0.0
    %1444 = vmatpush2.msra.mxu0 0.0
    %1445 = vmatprep.subr.mxu0 0.0
    %1446 = vmatpush2.msra.mxu0 0.0
    %1447 = vmatprep.mubr.f32.mxu0 0.0
    %1448 = vmatmul.mubr.f32.gmra.mxu0 %v1381
    %v1449 = vpop.f32.mrf.mxu0
    %v1450 = vadd.f32 0.0, %v1449
    %v1451 = vpop.f32.mrf.mxu0
    %1452 = vdwg.mxu0
    %v1454 = vsel %vm853, %v941, 0
    %1456 = vmatprep.subr.mxu0 0.0
    %1457 = vmatpush1.msra.mxu0 0.0
    %1458 = vmatprep.subr.mxu0 0.0
    %1459 = vmatpush1.msra.mxu0 0.0
    %1460 = vmatprep.subr.mxu0 0.0
    %1461 = vmatpush1.msra.mxu0 0.0
    %1462 = vmatprep.subr.mxu0 0.0
    %1463 = vmatpush1.msra.mxu0 0.0
    %1464 = vmatprep.subr.mxu0 0.0
    %1465 = vmatpush1.msra.mxu0 0.0
    %1466 = vmatprep.subr.mxu0 0.0
    %1467 = vmatpush1.msra.mxu0 0.0
    %1468 = vmatprep.subr.mxu0 0.0
    %1469 = vmatpush1.msra.mxu0 0.0
    %1470 = vmatprep.subr.mxu0 0.0
    %1471 = vmatpush1.msra.mxu0 0.0
    %1472 = vmatprep.subr.mxu0 0.0
    %1473 = vmatpush1.msra.mxu0 0.0
    %1474 = vmatprep.subr.mxu0 0.0
    %1475 = vmatpush1.msra.mxu0 0.0
    %1476 = vmatprep.subr.mxu0 0.0
    %1477 = vmatpush1.msra.mxu0 0.0
    %1478 = vmatprep.subr.mxu0 0.0
    %1479 = vmatpush1.msra.mxu0 0.0
    %1480 = vmatprep.subr.mxu0 0.0
    %1481 = vmatpush1.msra.mxu0 0.0
    %1482 = vmatprep.subr.mxu0 0.0
    %1483 = vmatpush1.msra.mxu0 0.0
    %1484 = vmatprep.subr.mxu0 0.0
    %1485 = vmatpush1.msra.mxu0 0.0
    %1486 = vmatprep.subr.mxu0 0.0
    %1487 = vmatpush1.msra.mxu0 %v226
    %1488 = vmatprep.subr.mxu0 0.0
    %1489 = vmatpush2.msra.mxu0 0.0
    %1490 = vmatprep.subr.mxu0 0.0
    %1491 = vmatpush2.msra.mxu0 0.0
    %1492 = vmatprep.subr.mxu0 0.0
    %1493 = vmatpush2.msra.mxu0 0.0
    %1494 = vmatprep.subr.mxu0 0.0
    %1495 = vmatpush2.msra.mxu0 0.0
    %1496 = vmatprep.subr.mxu0 0.0
    %1497 = vmatpush2.msra.mxu0 0.0
    %1498 = vmatprep.subr.mxu0 0.0
    %1499 = vmatpush2.msra.mxu0 0.0
    %1500 = vmatprep.subr.mxu0 0.0
    %1501 = vmatpush2.msra.mxu0 0.0
    %1502 = vmatprep.subr.mxu0 0.0
    %1503 = vmatpush2.msra.mxu0 0.0
    %1504 = vmatprep.subr.mxu0 0.0
    %1505 = vmatpush2.msra.mxu0 0.0
    %1506 = vmatprep.subr.mxu0 0.0
    %1507 = vmatpush2.msra.mxu0 0.0
    %1508 = vmatprep.subr.mxu0 0.0
    %1509 = vmatpush2.msra.mxu0 0.0
    %1510 = vmatprep.subr.mxu0 0.0
    %1511 = vmatpush2.msra.mxu0 0.0
    %1512 = vmatprep.subr.mxu0 0.0
    %1513 = vmatpush2.msra.mxu0 0.0
    %1514 = vmatprep.subr.mxu0 0.0
    %1515 = vmatpush2.msra.mxu0 0.0
    %1516 = vmatprep.subr.mxu0 0.0
    %1517 = vmatpush2.msra.mxu0 0.0
    %1518 = vmatprep.subr.mxu0 0.0
    %1519 = vmatpush2.msra.mxu0 0.0
    %1520 = vmatprep.mubr.f32.mxu0 0.0
    %1521 = vmatmul.mubr.f32.gmra.mxu0 %v1454
    %v1522 = vpop.f32.mrf.mxu0
    %v1523 = vadd.f32 0.0, %v1522
    %v1524 = vpop.f32.mrf.mxu0
    %1525 = vdwg.mxu0
    %v1526 = vsel %vm231, %v1012, 0.0
    %v1527 = vrot.slane %v1526, 4
    %v1528 = vadd.f32 %v1526, %v1527
    %v1529 = vrot.slane %v1528, 2
    %v1530 = vadd.f32 %v1528, %v1529
    %v1531 = vrot.slane %v1530, 1
    %v1532 = vadd.f32 %v1530, %v1531
    %v1533 = vsel %vm231, %v1085, 0.0
    %v1534 = vrot.slane %v1533, 4
    %v1535 = vadd.f32 %v1533, %v1534
    %v1536 = vrot.slane %v1535, 2
    %v1537 = vadd.f32 %v1535, %v1536
    %v1538 = vrot.slane %v1537, 1
    %v1539 = vadd.f32 %v1537, %v1538
    %v1540 = vsel %vm231, %v1158, 0.0
    %v1541 = vrot.slane %v1540, 4
    %v1542 = vadd.f32 %v1540, %v1541
    %v1543 = vrot.slane %v1542, 2
    %v1544 = vadd.f32 %v1542, %v1543
    %v1545 = vrot.slane %v1544, 1
    %v1546 = vadd.f32 %v1544, %v1545
    %v1547 = vsel %vm231, %v1231, 0.0
    %v1548 = vrot.slane %v1547, 4
    %v1549 = vadd.f32 %v1547, %v1548
    %v1550 = vrot.slane %v1549, 2
    %v1551 = vadd.f32 %v1549, %v1550
    %v1552 = vrot.slane %v1551, 1
    %v1553 = vadd.f32 %v1551, %v1552
    %v1554 = vsel %vm231, %v1304, 0.0
    %v1555 = vrot.slane %v1554, 4
    %v1556 = vadd.f32 %v1554, %v1555
    %v1557 = vrot.slane %v1556, 2
    %v1558 = vadd.f32 %v1556, %v1557
    %v1559 = vrot.slane %v1558, 1
    %v1560 = vadd.f32 %v1558, %v1559
    %v1561 = vsel %vm231, %v1377, 0.0
    %v1562 = vrot.slane %v1561, 4
    %v1563 = vadd.f32 %v1561, %v1562
    %v1564 = vrot.slane %v1563, 2
    %v1565 = vadd.f32 %v1563, %v1564
    %v1566 = vrot.slane %v1565, 1
    %v1567 = vadd.f32 %v1565, %v1566
    %v1568 = vsel %vm231, %v1450, 0.0
    %v1569 = vrot.slane %v1568, 4
    %v1570 = vadd.f32 %v1568, %v1569
    %v1571 = vrot.slane %v1570, 2
    %v1572 = vadd.f32 %v1570, %v1571
    %v1573 = vrot.slane %v1572, 1
    %v1574 = vadd.f32 %v1572, %v1573
    %v1575 = vsel %vm231, %v1523, 0.0
    %v1576 = vrot.slane %v1575, 4
    %v1577 = vadd.f32 %v1575, %v1576
    %v1578 = vrot.slane %v1577, 2
    %v1579 = vadd.f32 %v1577, %v1578
    %v1580 = vrot.slane %v1579, 1
    %v1581 = vadd.f32 %v1579, %v1580
    %v1582 = vmul.f32 %v1532, 0.125
    %v1583 = vmul.f32 %v1539, 0.125
    %v1584 = vmul.f32 %v1546, 0.125
    %v1585 = vmul.f32 %v1553, 0.125
    %v1586 = vmul.f32 %v1560, 0.125
    %v1587 = vmul.f32 %v1567, 0.125
    %v1588 = vmul.f32 %v1574, 0.125
    %v1589 = vmul.f32 %v1581, 0.125
    %v1590 = vld [vmem:[#allocation7] sm:$0xff]
    %v1591 = vld [vmem:[#allocation7 + $0x8] sm:$0xff]
    %v1592 = vld [vmem:[#allocation7 + $0x10] sm:$0xff]
    %v1593 = vld [vmem:[#allocation7 + $0x18] sm:$0xff]
    %v1594 = vld [vmem:[#allocation7 + $0x20] sm:$0xff]
    %v1595 = vld [vmem:[#allocation7 + $0x28] sm:$0xff]
    %v1596 = vld [vmem:[#allocation7 + $0x30] sm:$0xff]
    %v1597 = vld [vmem:[#allocation7 + $0x38] sm:$0xff]
    %v1598 = vld [vmem:[%s4] sm:$0x1]
    %v1600 = vlaneseq
    %v1601 = vshrl.u32 %v1600, 7
    %v1602 = vsub.s32 0, %v1601
    %v1603 = vrot.slane %v1598, %v1602
    %vm1613 = vcmask 1041409
    %v1614 = vsel %vm1613, %v1583, %v1582
    %vm1615 = vcmask 1042434
    %v1616 = vsel %vm1615, %v1584, %v1614
    %vm1617 = vcmask 1043459
    %v1618 = vsel %vm1617, %v1585, %v1616
    %vm1619 = vcmask 1044484
    %v1620 = vsel %vm1619, %v1586, %v1618
    %vm1621 = vcmask 1045509
    %v1622 = vsel %vm1621, %v1587, %v1620
    %vm1623 = vcmask 1046534
    %v1624 = vsel %vm1623, %v1588, %v1622
    %vm1625 = vcmask 1047559
    %v1626 = vsel %vm1625, %v1589, %v1624
    %v1627 = vsel %vm231, %v1626, 0
    %1629 = vmatprep.subr.mxu0 0.0
    %1630 = vmatpush1.msra.mxu0 0.0
    %1631 = vmatprep.subr.mxu0 0.0
    %1632 = vmatpush1.msra.mxu0 0.0
    %1633 = vmatprep.subr.mxu0 0.0
    %1634 = vmatpush1.msra.mxu0 0.0
    %1635 = vmatprep.subr.mxu0 0.0
    %1636 = vmatpush1.msra.mxu0 0.0
    %1637 = vmatprep.subr.mxu0 0.0
    %1638 = vmatpush1.msra.mxu0 0.0
    %1639 = vmatprep.subr.mxu0 0.0
    %1640 = vmatpush1.msra.mxu0 0.0
    %1641 = vmatprep.subr.mxu0 0.0
    %1642 = vmatpush1.msra.mxu0 0.0
    %1643 = vmatprep.subr.mxu0 0.0
    %1644 = vmatpush1.msra.mxu0 0.0
    %1645 = vmatprep.subr.mxu0 0.0
    %1646 = vmatpush1.msra.mxu0 %v1597
    %1647 = vmatprep.subr.mxu0 0.0
    %1648 = vmatpush1.msra.mxu0 %v1596
    %1649 = vmatprep.subr.mxu0 0.0
    %1650 = vmatpush1.msra.mxu0 %v1595
    %1651 = vmatprep.subr.mxu0 0.0
    %1652 = vmatpush1.msra.mxu0 %v1594
    %1653 = vmatprep.subr.mxu0 0.0
    %1654 = vmatpush1.msra.mxu0 %v1593
    %1655 = vmatprep.subr.mxu0 0.0
    %1656 = vmatpush1.msra.mxu0 %v1592
    %1657 = vmatprep.subr.mxu0 0.0
    %1658 = vmatpush1.msra.mxu0 %v1591
    %1659 = vmatprep.subr.mxu0 0.0
    %1660 = vmatpush1.msra.mxu0 %v1590
    %1661 = vmatprep.subr.mxu0 0.0
    %1662 = vmatpush2.msra.mxu0 0.0
    %1663 = vmatprep.subr.mxu0 0.0
    %1664 = vmatpush2.msra.mxu0 0.0
    %1665 = vmatprep.subr.mxu0 0.0
    %1666 = vmatpush2.msra.mxu0 0.0
    %1667 = vmatprep.subr.mxu0 0.0
    %1668 = vmatpush2.msra.mxu0 0.0
    %1669 = vmatprep.subr.mxu0 0.0
    %1670 = vmatpush2.msra.mxu0 0.0
    %1671 = vmatprep.subr.mxu0 0.0
    %1672 = vmatpush2.msra.mxu0 0.0
    %1673 = vmatprep.subr.mxu0 0.0
    %1674 = vmatpush2.msra.mxu0 0.0
    %1675 = vmatprep.subr.mxu0 0.0
    %1676 = vmatpush2.msra.mxu0 0.0
    %1677 = vmatprep.subr.mxu0 0.0
    %1678 = vmatpush2.msra.mxu0 0.0
    %1679 = vmatprep.subr.mxu0 0.0
    %1680 = vmatpush2.msra.mxu0 0.0
    %1681 = vmatprep.subr.mxu0 0.0
    %1682 = vmatpush2.msra.mxu0 0.0
    %1683 = vmatprep.subr.mxu0 0.0
    %1684 = vmatpush2.msra.mxu0 0.0
    %1685 = vmatprep.subr.mxu0 0.0
    %1686 = vmatpush2.msra.mxu0 0.0
    %1687 = vmatprep.subr.mxu0 0.0
    %1688 = vmatpush2.msra.mxu0 0.0
    %1689 = vmatprep.subr.mxu0 0.0
    %1690 = vmatpush2.msra.mxu0 0.0
    %1691 = vmatprep.subr.mxu0 0.0
    %1692 = vmatpush2.msra.mxu0 0.0
    %1693 = vmatprep.mubr.f32.mxu0 0.0
    %1694 = vmatmul.mubr.f32.gmra.mxu0 %v1627
    %v1695 = vpop.f32.mrf.mxu0
    %v1696 = vadd.f32 %v1603, %v1695
    %v1697 = vpop.f32.mrf.mxu0
    %1698 = vdwg.mxu0
    %1699 = vst.msk [vmem:[#allocation8] sm:$0xff] %vm231, %v1696
    // Predicated region
    $region34: #{tpu_custom_call.1} parent=1 // pred_check
      _
    $region35: #{tpu_custom_call.1} parent=1 // pred_check_branch
      %1701 = sbr.rel (0) target = $region37
    $region36: #{tpu_custom_call.1} parent=1 // pred_region
      %s1703 = ssub.s32 128, 128
      %1704 = vsyncadd [#allocation4], %s1703
      %s1706 = sshll.u32 [#allocation8], 4
      %s1707 = int_to_ptr.vmem [resolvable:$true] %s1706
      %1709 = dma.vmem_to_hbm [thread:$0]  %s1707, 128, %s5, [#allocation4]
    $region37: #{tpu_custom_call.1} parent=1 // pred_fallthru
      _
    // Predicated region
    $region38: #{tpu_custom_call.1} parent=1 // pred_check
      _
    $region39: #{tpu_custom_call.1} parent=1 // pred_check_branch
      %1711 = sbr.rel (0) target = $region41
    $region40: #{tpu_custom_call.1} parent=1 // pred_region
      %1712 = dma.done [#allocation4], 128
    $region41: #{tpu_custom_call.1} parent=1 // pred_fallthru
      _
    %1713 = vsyncpa [#allocation3], 1
    %1714 = vsyncpa [#allocation6], 1
    %1715 = vsyncpa [#allocation4], 1

</llo_original>
